<compile_context>
chip_gen: v6e
topology: v6e:2x2x1
jax: 0.10.0
libtpu: 0.0.40
codegen_flags: <defaults>
</compile_context>

<pallas_src>
import jax
import jax.numpy as jnp
from jax import lax
from jax.experimental import pallas as pl
from jax.experimental.pallas import tpu as pltpu

INPUT_SIZE = 64
HIDDEN_SIZE = 16
NUM_LAYERS = 2
OUTPUT_SIZE = 2


def make_lstm_fc_kernel(T, B, H):
    """Build the kernel with static T, B, H closed over (x is passed flattened to (T*B, D))."""

    def kernel(x2d_ref, wih0_ref, whh0_ref, b0_ref, w1s_ref, b1_ref,
               wfc_ref, bfc_ref, out_ref):
        # x2d_ref: (T*B, D) time-major flattened input
        # wih0:    (D, 4H)   layer-0 input->gates (pre-transposed)
        # whh0:    (H, 4H)   layer-0 hidden->gates (pre-transposed)
        # w1s:     (2H, 4H)  layer-1 stacked [Wih1^T ; Whh1^T]
        # b0, b1:  (1, 4H)   combined b_ih + b_hh
        # wfc:     (H, OUT), bfc: (1, OUT)
        # out_ref: (B, OUT)
        wih0 = wih0_ref[...]
        whh0 = whh0_ref[...]
        b0 = b0_ref[...]
        w1s = w1s_ref[...]
        b1 = b1_ref[...]

        # Hoisted layer-0 input projection: a single well-filled MXU matmul, off the
        # serial per-step dependency chain. Bias folded in here too.
        gx0 = jnp.dot(x2d_ref[...], wih0, preferred_element_type=jnp.float32) + b0

        def activate(gates):
            # One full-(B,4H) sigmoid issue + one tanh issue per cell.
            sg = jax.nn.sigmoid(gates)
            i = sg[:, 0 * H:1 * H]
            f = sg[:, 1 * H:2 * H]
            o = sg[:, 3 * H:4 * H]
            g = jnp.tanh(gates[:, 2 * H:3 * H])
            return i, f, g, o

        h0 = jnp.zeros((B, H), jnp.float32)
        c0 = jnp.zeros((B, H), jnp.float32)
        h1 = jnp.zeros((B, H), jnp.float32)
        c1 = jnp.zeros((B, H), jnp.float32)

        # Fully unrolled time loop (T static): static slices, scheduler sees all steps.
        for t in range(T):
            # layer 0: only the recurrent matmul remains on the per-step path.
            gates0 = gx0[t * B:(t + 1) * B, :] + jnp.dot(
                h0, whh0, preferred_element_type=jnp.float32)
            i0, f0, g0, o0 = activate(gates0)
            c0 = f0 * c0 + i0 * g0
            h0 = o0 * jnp.tanh(c0)

            # TODO(synk): nn.LSTM inter-layer dropout is training-only; eval forward is identity.

            # layer 1: single fused matmul over the concatenated (input, hidden) state.
            hcat = jnp.concatenate([h0, h1], axis=-1)              # (B, 2H)
            gates1 = jnp.dot(hcat, w1s, preferred_element_type=jnp.float32) + b1
            i1, f1, g1, o1 = activate(gates1)
            c1 = f1 * c1 + i1 * g1
            h1 = o1 * jnp.tanh(c1)

        # fc on lstm_out[:, -1, :] (top-layer hidden at the last timestep)
        out_ref[...] = (jnp.dot(h1, wfc_ref[...], preferred_element_type=jnp.float32)
                        + bfc_ref[...])

    return kernel


def lstm_forward(x, params):
    """x: (B, T, D_in) batch-first (PyTorch convention). Returns (B, OUTPUT_SIZE)."""
    B, T, D = x.shape
    # time-major + flatten (T, B) into one M axis outside the kernel (cheap XLA ops),
    # so the kernel never has to reshape VMEM data.
    x2d = jnp.transpose(x, (1, 0, 2)).reshape(T * B, D).astype(jnp.float32)
    wih0, whh0, b0, w1s, b1, wfc, bfc = params

    vmem = lambda: pl.BlockSpec(memory_space=pltpu.MemorySpace.VMEM)
    # NOTE: everything (sequence + weights) is tiny and fully VMEM-resident; if T/B ever
    # grow large, make T a pipelined grid axis (x BlockSpec (1,B,D)) and B a "parallel"
    # grid axis, and budget for v7x's 64 MiB VMEM via pltpu.CompilerParams(vmem_limit_bytes=...).
    return pl.pallas_call(
        make_lstm_fc_kernel(T, B, HIDDEN_SIZE),
        out_shape=jax.ShapeDtypeStruct((B, OUTPUT_SIZE), jnp.float32),
        in_specs=[vmem() for _ in range(8)],
        out_specs=vmem(),
    )(x2d, wih0, whh0, b0, w1s, b1, wfc, bfc)


def init_params(key):
    """Deterministic init matching PyTorch parameter shapes (uniform(-1/sqrt(H), 1/sqrt(H)))."""
    H, D, OUT = HIDDEN_SIZE, INPUT_SIZE, OUTPUT_SIZE
    k = 1.0 / jnp.sqrt(jnp.float32(H))
    keys = jax.random.split(key, 10)
    u = lambda kk, shape: jax.random.uniform(kk, shape, jnp.float32, -k, k)

    # layer 0
    w_ih_l0 = u(keys[0], (4 * H, D))
    w_hh_l0 = u(keys[1], (4 * H, H))
    b_ih_l0 = u(keys[2], (4 * H,))
    b_hh_l0 = u(keys[3], (4 * H,))
    # layer 1 (input is hidden of layer 0)
    w_ih_l1 = u(keys[4], (4 * H, H))
    w_hh_l1 = u(keys[5], (4 * H, H))
    b_ih_l1 = u(keys[6], (4 * H,))
    b_hh_l1 = u(keys[7], (4 * H,))
    # fc
    w_fc = u(keys[8], (OUT, H))
    b_fc = u(keys[9], (OUT,))

    # layer-1 weights pre-stacked along the contraction dim so the kernel does a single
    # [h0, h1] @ w1s matmul per step.
    w1_stacked = jnp.concatenate([w_ih_l1.T, w_hh_l1.T], axis=0)   # (2H, 4H)

    params = (
        w_ih_l0.T, w_hh_l0.T, (b_ih_l0 + b_hh_l0).reshape(1, 4 * H),
        w1_stacked, (b_ih_l1 + b_hh_l1).reshape(1, 4 * H),
        w_fc.T, b_fc.reshape(1, OUT),
    )
    return params


def lstm_forward_ref(x, params):
    """Pure-JAX reference (PyTorch eval semantics) for correctness checking."""
    wih0, whh0, b0, w1s, b1, wfc, bfc = params
    H = HIDDEN_SIZE
    wih1, whh1 = w1s[:H], w1s[H:]
    B, T, D = x.shape

    def cell(x_t, h_prev, c_prev, wih, whh, b):
        gates = x_t @ wih + h_prev @ whh + b
        i = jax.nn.sigmoid(gates[:, 0 * H:1 * H])
        f = jax.nn.sigmoid(gates[:, 1 * H:2 * H])
        g = jnp.tanh(gates[:, 2 * H:3 * H])
        o = jax.nn.sigmoid(gates[:, 3 * H:4 * H])
        c = f * c_prev + i * g
        return o * jnp.tanh(c), c

    def step(carry, x_t):
        h0, c0, h1, c1 = carry
        h0, c0 = cell(x_t, h0, c0, wih0, whh0, b0)
        h1, c1 = cell(h0, h1, c1, wih1, whh1, b1)
        return (h0, c0, h1, c1), None

    zeros = jnp.zeros((B, H), jnp.float32)
    (h0, c0, h1, c1), _ = lax.scan(step, (zeros,) * 4, jnp.transpose(x, (1, 0, 2)))
    return h1 @ wfc + bfc


if __name__ == "__main__":
    key = jax.random.PRNGKey(0)
    kp, kx = jax.random.split(key)

    B, T = 2, 8
    x = jax.random.normal(kx, (B, T, INPUT_SIZE), jnp.float32)   # batch-first, like PyTorch
    params = init_params(kp)

    out = jax.block_until_ready(lstm_forward(x, params))
    ref = jax.block_until_ready(lstm_forward_ref(x, params))

    assert out.shape == (B, OUTPUT_SIZE)
    assert jnp.allclose(out, ref, atol=1e-5, rtol=1e-5), (out, ref)

    print("KERNEL_OK")
</pallas_src>

<mosaic_0001>
module attributes {stable_mosaic.version = 11 : i64} {
  func.func @kernel(%arg0: memref<16x64xf32, #tpu.memory_space<vmem>>, %arg1: memref<64x64xf32, #tpu.memory_space<vmem>>, %arg2: memref<16x64xf32, #tpu.memory_space<vmem>>, %arg3: memref<1x64xf32, #tpu.memory_space<vmem>>, %arg4: memref<32x64xf32, #tpu.memory_space<vmem>>, %arg5: memref<1x64xf32, #tpu.memory_space<vmem>>, %arg6: memref<16x2xf32, #tpu.memory_space<vmem>>, %arg7: memref<1x2xf32, #tpu.memory_space<vmem>>, %arg8: memref<2x2xf32, #tpu.memory_space<vmem>>) attributes {dimension_semantics = [], scalar_prefetch = 0 : i64, scratch_operands = 0 : i64, tpu.core_type = #tpu.core_type<tc>} {
    %c0 = arith.constant 0 : index
    %c0_0 = arith.constant 0 : index
    %0 = vector.load %arg1[%c0, %c0_0] : memref<64x64xf32, #tpu.memory_space<vmem>>, vector<64x64xf32>
    %c0_1 = arith.constant 0 : index
    %c0_2 = arith.constant 0 : index
    %1 = vector.load %arg2[%c0_1, %c0_2] : memref<16x64xf32, #tpu.memory_space<vmem>>, vector<16x64xf32>
    %c0_3 = arith.constant 0 : index
    %c0_4 = arith.constant 0 : index
    %2 = vector.load %arg3[%c0_3, %c0_4] : memref<1x64xf32, #tpu.memory_space<vmem>>, vector<1x64xf32>
    %c0_5 = arith.constant 0 : index
    %c0_6 = arith.constant 0 : index
    %3 = vector.load %arg4[%c0_5, %c0_6] : memref<32x64xf32, #tpu.memory_space<vmem>>, vector<32x64xf32>
    %c0_7 = arith.constant 0 : index
    %c0_8 = arith.constant 0 : index
    %4 = vector.load %arg5[%c0_7, %c0_8] : memref<1x64xf32, #tpu.memory_space<vmem>>, vector<1x64xf32>
    %c0_9 = arith.constant 0 : index
    %c0_10 = arith.constant 0 : index
    %5 = vector.load %arg0[%c0_9, %c0_10] : memref<16x64xf32, #tpu.memory_space<vmem>>, vector<16x64xf32>
    %cst = arith.constant dense<0.000000e+00> : vector<16x64xf32>
    %6 = tpu.matmul %5, %0, %cst {dimension_numbers = #tpu.dot_dimension_numbers<[1], [0], [0], [1], [0, 0, 1, 1], [], []>} : vector<16x64xf32>, vector<64x64xf32>, vector<16x64xf32> -> vector<16x64xf32>
    %7 = vector.broadcast %2 : vector<1x64xf32> to vector<16x64xf32>
    %8 = arith.addf %6, %7 : vector<16x64xf32>
    %cst_11 = arith.constant 0.000000e+00 : f32
    %9 = vector.broadcast %cst_11 : f32 to vector<2x16xf32>
    %cst_12 = arith.constant 0.000000e+00 : f32
    %10 = vector.broadcast %cst_12 : f32 to vector<2x16xf32>
    %cst_13 = arith.constant 0.000000e+00 : f32
    %11 = vector.broadcast %cst_13 : f32 to vector<2x16xf32>
    %cst_14 = arith.constant 0.000000e+00 : f32
    %12 = vector.broadcast %cst_14 : f32 to vector<2x16xf32>
    %13 = vector.extract_strided_slice %8 {offsets = [0, 0], sizes = [2, 64], strides = [1, 1]} : vector<16x64xf32> to vector<2x64xf32>
    %cst_15 = arith.constant dense<0.000000e+00> : vector<2x64xf32>
    %14 = tpu.matmul %9, %1, %cst_15 {dimension_numbers = #tpu.dot_dimension_numbers<[1], [0], [0], [1], [0, 0, 1, 1], [], []>} : vector<2x16xf32>, vector<16x64xf32>, vector<2x64xf32> -> vector<2x64xf32>
    %15 = arith.addf %13, %14 : vector<2x64xf32>
    %16 = arith.negf %15 : vector<2x64xf32>
    %17 = math.exp %16 : vector<2x64xf32>
    %cst_16 = arith.constant 1.000000e+00 : f32
    %18 = vector.broadcast %cst_16 : f32 to vector<2x64xf32>
    %19 = arith.addf %18, %17 : vector<2x64xf32>
    %20 = arith.divf %18, %19 : vector<2x64xf32>
    %21 = vector.extract_strided_slice %20 {offsets = [0, 0], sizes = [2, 16], strides = [1, 1]} : vector<2x64xf32> to vector<2x16xf32>
    %22 = vector.extract_strided_slice %20 {offsets = [0, 16], sizes = [2, 16], strides = [1, 1]} : vector<2x64xf32> to vector<2x16xf32>
    %23 = vector.extract_strided_slice %20 {offsets = [0, 48], sizes = [2, 16], strides = [1, 1]} : vector<2x64xf32> to vector<2x16xf32>
    %24 = vector.extract_strided_slice %15 {offsets = [0, 32], sizes = [2, 16], strides = [1, 1]} : vector<2x64xf32> to vector<2x16xf32>
    %25 = math.tanh %24 : vector<2x16xf32>
    %26 = arith.mulf %22, %10 : vector<2x16xf32>
    %27 = arith.mulf %21, %25 : vector<2x16xf32>
    %28 = arith.addf %26, %27 : vector<2x16xf32>
    %29 = math.tanh %28 : vector<2x16xf32>
    %30 = arith.mulf %23, %29 : vector<2x16xf32>
    %31 = tpu.concatenate %30, %11 in 1 : vector<2x16xf32>, vector<2x16xf32> -> vector<2x32xf32>
    %cst_17 = arith.constant dense<0.000000e+00> : vector<2x64xf32>
    %32 = tpu.matmul %31, %3, %cst_17 {dimension_numbers = #tpu.dot_dimension_numbers<[1], [0], [0], [1], [0, 0, 1, 1], [], []>} : vector<2x32xf32>, vector<32x64xf32>, vector<2x64xf32> -> vector<2x64xf32>
    %33 = vector.broadcast %4 : vector<1x64xf32> to vector<2x64xf32>
    %34 = arith.addf %32, %33 : vector<2x64xf32>
    %35 = arith.negf %34 : vector<2x64xf32>
    %36 = math.exp %35 : vector<2x64xf32>
    %cst_18 = arith.constant 1.000000e+00 : f32
    %37 = vector.broadcast %cst_18 : f32 to vector<2x64xf32>
    %38 = arith.addf %37, %36 : vector<2x64xf32>
    %39 = arith.divf %37, %38 : vector<2x64xf32>
    %40 = vector.extract_strided_slice %39 {offsets = [0, 0], sizes = [2, 16], strides = [1, 1]} : vector<2x64xf32> to vector<2x16xf32>
    %41 = vector.extract_strided_slice %39 {offsets = [0, 16], sizes = [2, 16], strides = [1, 1]} : vector<2x64xf32> to vector<2x16xf32>
    %42 = vector.extract_strided_slice %39 {offsets = [0, 48], sizes = [2, 16], strides = [1, 1]} : vector<2x64xf32> to vector<2x16xf32>
    %43 = vector.extract_strided_slice %34 {offsets = [0, 32], sizes = [2, 16], strides = [1, 1]} : vector<2x64xf32> to vector<2x16xf32>
    %44 = math.tanh %43 : vector<2x16xf32>
    %45 = arith.mulf %41, %12 : vector<2x16xf32>
    %46 = arith.mulf %40, %44 : vector<2x16xf32>
    %47 = arith.addf %45, %46 : vector<2x16xf32>
    %48 = math.tanh %47 : vector<2x16xf32>
    %49 = arith.mulf %42, %48 : vector<2x16xf32>
    %50 = vector.extract_strided_slice %8 {offsets = [2, 0], sizes = [2, 64], strides = [1, 1]} : vector<16x64xf32> to vector<2x64xf32>
    %cst_19 = arith.constant dense<0.000000e+00> : vector<2x64xf32>
    %51 = tpu.matmul %30, %1, %cst_19 {dimension_numbers = #tpu.dot_dimension_numbers<[1], [0], [0], [1], [0, 0, 1, 1], [], []>} : vector<2x16xf32>, vector<16x64xf32>, vector<2x64xf32> -> vector<2x64xf32>
    %52 = arith.addf %50, %51 : vector<2x64xf32>
    %53 = arith.negf %52 : vector<2x64xf32>
    %54 = math.exp %53 : vector<2x64xf32>
    %cst_20 = arith.constant 1.000000e+00 : f32
    %55 = vector.broadcast %cst_20 : f32 to vector<2x64xf32>
    %56 = arith.addf %55, %54 : vector<2x64xf32>
    %57 = arith.divf %55, %56 : vector<2x64xf32>
    %58 = vector.extract_strided_slice %57 {offsets = [0, 0], sizes = [2, 16], strides = [1, 1]} : vector<2x64xf32> to vector<2x16xf32>
    %59 = vector.extract_strided_slice %57 {offsets = [0, 16], sizes = [2, 16], strides = [1, 1]} : vector<2x64xf32> to vector<2x16xf32>
    %60 = vector.extract_strided_slice %57 {offsets = [0, 48], sizes = [2, 16], strides = [1, 1]} : vector<2x64xf32> to vector<2x16xf32>
    %61 = vector.extract_strided_slice %52 {offsets = [0, 32], sizes = [2, 16], strides = [1, 1]} : vector<2x64xf32> to vector<2x16xf32>
    %62 = math.tanh %61 : vector<2x16xf32>
    %63 = arith.mulf %59, %28 : vector<2x16xf32>
    %64 = arith.mulf %58, %62 : vector<2x16xf32>
    %65 = arith.addf %63, %64 : vector<2x16xf32>
    %66 = math.tanh %65 : vector<2x16xf32>
    %67 = arith.mulf %60, %66 : vector<2x16xf32>
    %68 = tpu.concatenate %67, %49 in 1 : vector<2x16xf32>, vector<2x16xf32> -> vector<2x32xf32>
    %cst_21 = arith.constant dense<0.000000e+00> : vector<2x64xf32>
    %69 = tpu.matmul %68, %3, %cst_21 {dimension_numbers = #tpu.dot_dimension_numbers<[1], [0], [0], [1], [0, 0, 1, 1], [], []>} : vector<2x32xf32>, vector<32x64xf32>, vector<2x64xf32> -> vector<2x64xf32>
    %70 = vector.broadcast %4 : vector<1x64xf32> to vector<2x64xf32>
    %71 = arith.addf %69, %70 : vector<2x64xf32>
    %72 = arith.negf %71 : vector<2x64xf32>
    %73 = math.exp %72 : vector<2x64xf32>
    %cst_22 = arith.constant 1.000000e+00 : f32
    %74 = vector.broadcast %cst_22 : f32 to vector<2x64xf32>
    %75 = arith.addf %74, %73 : vector<2x64xf32>
    %76 = arith.divf %74, %75 : vector<2x64xf32>
    %77 = vector.extract_strided_slice %76 {offsets = [0, 0], sizes = [2, 16], strides = [1, 1]} : vector<2x64xf32> to vector<2x16xf32>
    %78 = vector.extract_strided_slice %76 {offsets = [0, 16], sizes = [2, 16], strides = [1, 1]} : vector<2x64xf32> to vector<2x16xf32>
    %79 = vector.extract_strided_slice %76 {offsets = [0, 48], sizes = [2, 16], strides = [1, 1]} : vector<2x64xf32> to vector<2x16xf32>
    %80 = vector.extract_strided_slice %71 {offsets = [0, 32], sizes = [2, 16], strides = [1, 1]} : vector<2x64xf32> to vector<2x16xf32>
    %81 = math.tanh %80 : vector<2x16xf32>
    %82 = arith.mulf %78, %47 : vector<2x16xf32>
    %83 = arith.mulf %77, %81 : vector<2x16xf32>
    %84 = arith.addf %82, %83 : vector<2x16xf32>
    %85 = math.tanh %84 : vector<2x16xf32>
    %86 = arith.mulf %79, %85 : vector<2x16xf32>
    %87 = vector.extract_strided_slice %8 {offsets = [4, 0], sizes = [2, 64], strides = [1, 1]} : vector<16x64xf32> to vector<2x64xf32>
    %cst_23 = arith.constant dense<0.000000e+00> : vector<2x64xf32>
    %88 = tpu.matmul %67, %1, %cst_23 {dimension_numbers = #tpu.dot_dimension_numbers<[1], [0], [0], [1], [0, 0, 1, 1], [], []>} : vector<2x16xf32>, vector<16x64xf32>, vector<2x64xf32> -> vector<2x64xf32>
    %89 = arith.addf %87, %88 : vector<2x64xf32>
    %90 = arith.negf %89 : vector<2x64xf32>
    %91 = math.exp %90 : vector<2x64xf32>
    %cst_24 = arith.constant 1.000000e+00 : f32
    %92 = vector.broadcast %cst_24 : f32 to vector<2x64xf32>
    %93 = arith.addf %92, %91 : vector<2x64xf32>
    %94 = arith.divf %92, %93 : vector<2x64xf32>
    %95 = vector.extract_strided_slice %94 {offsets = [0, 0], sizes = [2, 16], strides = [1, 1]} : vector<2x64xf32> to vector<2x16xf32>
    %96 = vector.extract_strided_slice %94 {offsets = [0, 16], sizes = [2, 16], strides = [1, 1]} : vector<2x64xf32> to vector<2x16xf32>
    %97 = vector.extract_strided_slice %94 {offsets = [0, 48], sizes = [2, 16], strides = [1, 1]} : vector<2x64xf32> to vector<2x16xf32>
    %98 = vector.extract_strided_slice %89 {offsets = [0, 32], sizes = [2, 16], strides = [1, 1]} : vector<2x64xf32> to vector<2x16xf32>
    %99 = math.tanh %98 : vector<2x16xf32>
    %100 = arith.mulf %96, %65 : vector<2x16xf32>
    %101 = arith.mulf %95, %99 : vector<2x16xf32>
    %102 = arith.addf %100, %101 : vector<2x16xf32>
    %103 = math.tanh %102 : vector<2x16xf32>
    %104 = arith.mulf %97, %103 : vector<2x16xf32>
    %105 = tpu.concatenate %104, %86 in 1 : vector<2x16xf32>, vector<2x16xf32> -> vector<2x32xf32>
    %cst_25 = arith.constant dense<0.000000e+00> : vector<2x64xf32>
    %106 = tpu.matmul %105, %3, %cst_25 {dimension_numbers = #tpu.dot_dimension_numbers<[1], [0], [0], [1], [0, 0, 1, 1], [], []>} : vector<2x32xf32>, vector<32x64xf32>, vector<2x64xf32> -> vector<2x64xf32>
    %107 = vector.broadcast %4 : vector<1x64xf32> to vector<2x64xf32>
    %108 = arith.addf %106, %107 : vector<2x64xf32>
    %109 = arith.negf %108 : vector<2x64xf32>
    %110 = math.exp %109 : vector<2x64xf32>
    %cst_26 = arith.constant 1.000000e+00 : f32
    %111 = vector.broadcast %cst_26 : f32 to vector<2x64xf32>
    %112 = arith.addf %111, %110 : vector<2x64xf32>
    %113 = arith.divf %111, %112 : vector<2x64xf32>
    %114 = vector.extract_strided_slice %113 {offsets = [0, 0], sizes = [2, 16], strides = [1, 1]} : vector<2x64xf32> to vector<2x16xf32>
    %115 = vector.extract_strided_slice %113 {offsets = [0, 16], sizes = [2, 16], strides = [1, 1]} : vector<2x64xf32> to vector<2x16xf32>
    %116 = vector.extract_strided_slice %113 {offsets = [0, 48], sizes = [2, 16], strides = [1, 1]} : vector<2x64xf32> to vector<2x16xf32>
    %117 = vector.extract_strided_slice %108 {offsets = [0, 32], sizes = [2, 16], strides = [1, 1]} : vector<2x64xf32> to vector<2x16xf32>
    %118 = math.tanh %117 : vector<2x16xf32>
    %119 = arith.mulf %115, %84 : vector<2x16xf32>
    %120 = arith.mulf %114, %118 : vector<2x16xf32>
    %121 = arith.addf %119, %120 : vector<2x16xf32>
    %122 = math.tanh %121 : vector<2x16xf32>
    %123 = arith.mulf %116, %122 : vector<2x16xf32>
    %124 = vector.extract_strided_slice %8 {offsets = [6, 0], sizes = [2, 64], strides = [1, 1]} : vector<16x64xf32> to vector<2x64xf32>
    %cst_27 = arith.constant dense<0.000000e+00> : vector<2x64xf32>
    %125 = tpu.matmul %104, %1, %cst_27 {dimension_numbers = #tpu.dot_dimension_numbers<[1], [0], [0], [1], [0, 0, 1, 1], [], []>} : vector<2x16xf32>, vector<16x64xf32>, vector<2x64xf32> -> vector<2x64xf32>
    %126 = arith.addf %124, %125 : vector<2x64xf32>
    %127 = arith.negf %126 : vector<2x64xf32>
    %128 = math.exp %127 : vector<2x64xf32>
    %cst_28 = arith.constant 1.000000e+00 : f32
    %129 = vector.broadcast %cst_28 : f32 to vector<2x64xf32>
    %130 = arith.addf %129, %128 : vector<2x64xf32>
    %131 = arith.divf %129, %130 : vector<2x64xf32>
    %132 = vector.extract_strided_slice %131 {offsets = [0, 0], sizes = [2, 16], strides = [1, 1]} : vector<2x64xf32> to vector<2x16xf32>
    %133 = vector.extract_strided_slice %131 {offsets = [0, 16], sizes = [2, 16], strides = [1, 1]} : vector<2x64xf32> to vector<2x16xf32>
    %134 = vector.extract_strided_slice %131 {offsets = [0, 48], sizes = [2, 16], strides = [1, 1]} : vector<2x64xf32> to vector<2x16xf32>
    %135 = vector.extract_strided_slice %126 {offsets = [0, 32], sizes = [2, 16], strides = [1, 1]} : vector<2x64xf32> to vector<2x16xf32>
    %136 = math.tanh %135 : vector<2x16xf32>
    %137 = arith.mulf %133, %102 : vector<2x16xf32>
    %138 = arith.mulf %132, %136 : vector<2x16xf32>
    %139 = arith.addf %137, %138 : vector<2x16xf32>
    %140 = math.tanh %139 : vector<2x16xf32>
    %141 = arith.mulf %134, %140 : vector<2x16xf32>
    %142 = tpu.concatenate %141, %123 in 1 : vector<2x16xf32>, vector<2x16xf32> -> vector<2x32xf32>
    %cst_29 = arith.constant dense<0.000000e+00> : vector<2x64xf32>
    %143 = tpu.matmul %142, %3, %cst_29 {dimension_numbers = #tpu.dot_dimension_numbers<[1], [0], [0], [1], [0, 0, 1, 1], [], []>} : vector<2x32xf32>, vector<32x64xf32>, vector<2x64xf32> -> vector<2x64xf32>
    %144 = vector.broadcast %4 : vector<1x64xf32> to vector<2x64xf32>
    %145 = arith.addf %143, %144 : vector<2x64xf32>
    %146 = arith.negf %145 : vector<2x64xf32>
    %147 = math.exp %146 : vector<2x64xf32>
    %cst_30 = arith.constant 1.000000e+00 : f32
    %148 = vector.broadcast %cst_30 : f32 to vector<2x64xf32>
    %149 = arith.addf %148, %147 : vector<2x64xf32>
    %150 = arith.divf %148, %149 : vector<2x64xf32>
    %151 = vector.extract_strided_slice %150 {offsets = [0, 0], sizes = [2, 16], strides = [1, 1]} : vector<2x64xf32> to vector<2x16xf32>
    %152 = vector.extract_strided_slice %150 {offsets = [0, 16], sizes = [2, 16], strides = [1, 1]} : vector<2x64xf32> to vector<2x16xf32>
    %153 = vector.extract_strided_slice %150 {offsets = [0, 48], sizes = [2, 16], strides = [1, 1]} : vector<2x64xf32> to vector<2x16xf32>
    %154 = vector.extract_strided_slice %145 {offsets = [0, 32], sizes = [2, 16], strides = [1, 1]} : vector<2x64xf32> to vector<2x16xf32>
    %155 = math.tanh %154 : vector<2x16xf32>
    %156 = arith.mulf %152, %121 : vector<2x16xf32>
    %157 = arith.mulf %151, %155 : vector<2x16xf32>
    %158 = arith.addf %156, %157 : vector<2x16xf32>
    %159 = math.tanh %158 : vector<2x16xf32>
    %160 = arith.mulf %153, %159 : vector<2x16xf32>
    %161 = vector.extract_strided_slice %8 {offsets = [8, 0], sizes = [2, 64], strides = [1, 1]} : vector<16x64xf32> to vector<2x64xf32>
    %cst_31 = arith.constant dense<0.000000e+00> : vector<2x64xf32>
    %162 = tpu.matmul %141, %1, %cst_31 {dimension_numbers = #tpu.dot_dimension_numbers<[1], [0], [0], [1], [0, 0, 1, 1], [], []>} : vector<2x16xf32>, vector<16x64xf32>, vector<2x64xf32> -> vector<2x64xf32>
    %163 = arith.addf %161, %162 : vector<2x64xf32>
    %164 = arith.negf %163 : vector<2x64xf32>
    %165 = math.exp %164 : vector<2x64xf32>
    %cst_32 = arith.constant 1.000000e+00 : f32
    %166 = vector.broadcast %cst_32 : f32 to vector<2x64xf32>
    %167 = arith.addf %166, %165 : vector<2x64xf32>
    %168 = arith.divf %166, %167 : vector<2x64xf32>
    %169 = vector.extract_strided_slice %168 {offsets = [0, 0], sizes = [2, 16], strides = [1, 1]} : vector<2x64xf32> to vector<2x16xf32>
    %170 = vector.extract_strided_slice %168 {offsets = [0, 16], sizes = [2, 16], strides = [1, 1]} : vector<2x64xf32> to vector<2x16xf32>
    %171 = vector.extract_strided_slice %168 {offsets = [0, 48], sizes = [2, 16], strides = [1, 1]} : vector<2x64xf32> to vector<2x16xf32>
    %172 = vector.extract_strided_slice %163 {offsets = [0, 32], sizes = [2, 16], strides = [1, 1]} : vector<2x64xf32> to vector<2x16xf32>
    %173 = math.tanh %172 : vector<2x16xf32>
    %174 = arith.mulf %170, %139 : vector<2x16xf32>
    %175 = arith.mulf %169, %173 : vector<2x16xf32>
    %176 = arith.addf %174, %175 : vector<2x16xf32>
    %177 = math.tanh %176 : vector<2x16xf32>
    %178 = arith.mulf %171, %177 : vector<2x16xf32>
    %179 = tpu.concatenate %178, %160 in 1 : vector<2x16xf32>, vector<2x16xf32> -> vector<2x32xf32>
    %cst_33 = arith.constant dense<0.000000e+00> : vector<2x64xf32>
    %180 = tpu.matmul %179, %3, %cst_33 {dimension_numbers = #tpu.dot_dimension_numbers<[1], [0], [0], [1], [0, 0, 1, 1], [], []>} : vector<2x32xf32>, vector<32x64xf32>, vector<2x64xf32> -> vector<2x64xf32>
    %181 = vector.broadcast %4 : vector<1x64xf32> to vector<2x64xf32>
    %182 = arith.addf %180, %181 : vector<2x64xf32>
    %183 = arith.negf %182 : vector<2x64xf32>
    %184 = math.exp %183 : vector<2x64xf32>
    %cst_34 = arith.constant 1.000000e+00 : f32
    %185 = vector.broadcast %cst_34 : f32 to vector<2x64xf32>
    %186 = arith.addf %185, %184 : vector<2x64xf32>
    %187 = arith.divf %185, %186 : vector<2x64xf32>
    %188 = vector.extract_strided_slice %187 {offsets = [0, 0], sizes = [2, 16], strides = [1, 1]} : vector<2x64xf32> to vector<2x16xf32>
    %189 = vector.extract_strided_slice %187 {offsets = [0, 16], sizes = [2, 16], strides = [1, 1]} : vector<2x64xf32> to vector<2x16xf32>
    %190 = vector.extract_strided_slice %187 {offsets = [0, 48], sizes = [2, 16], strides = [1, 1]} : vector<2x64xf32> to vector<2x16xf32>
    %191 = vector.extract_strided_slice %182 {offsets = [0, 32], sizes = [2, 16], strides = [1, 1]} : vector<2x64xf32> to vector<2x16xf32>
    %192 = math.tanh %191 : vector<2x16xf32>
    %193 = arith.mulf %189, %158 : vector<2x16xf32>
    %194 = arith.mulf %188, %192 : vector<2x16xf32>
    %195 = arith.addf %193, %194 : vector<2x16xf32>
    %196 = math.tanh %195 : vector<2x16xf32>
    %197 = arith.mulf %190, %196 : vector<2x16xf32>
    %198 = vector.extract_strided_slice %8 {offsets = [10, 0], sizes = [2, 64], strides = [1, 1]} : vector<16x64xf32> to vector<2x64xf32>
    %cst_35 = arith.constant dense<0.000000e+00> : vector<2x64xf32>
    %199 = tpu.matmul %178, %1, %cst_35 {dimension_numbers = #tpu.dot_dimension_numbers<[1], [0], [0], [1], [0, 0, 1, 1], [], []>} : vector<2x16xf32>, vector<16x64xf32>, vector<2x64xf32> -> vector<2x64xf32>
    %200 = arith.addf %198, %199 : vector<2x64xf32>
    %201 = arith.negf %200 : vector<2x64xf32>
    %202 = math.exp %201 : vector<2x64xf32>
    %cst_36 = arith.constant 1.000000e+00 : f32
    %203 = vector.broadcast %cst_36 : f32 to vector<2x64xf32>
    %204 = arith.addf %203, %202 : vector<2x64xf32>
    %205 = arith.divf %203, %204 : vector<2x64xf32>
    %206 = vector.extract_strided_slice %205 {offsets = [0, 0], sizes = [2, 16], strides = [1, 1]} : vector<2x64xf32> to vector<2x16xf32>
    %207 = vector.extract_strided_slice %205 {offsets = [0, 16], sizes = [2, 16], strides = [1, 1]} : vector<2x64xf32> to vector<2x16xf32>
    %208 = vector.extract_strided_slice %205 {offsets = [0, 48], sizes = [2, 16], strides = [1, 1]} : vector<2x64xf32> to vector<2x16xf32>
    %209 = vector.extract_strided_slice %200 {offsets = [0, 32], sizes = [2, 16], strides = [1, 1]} : vector<2x64xf32> to vector<2x16xf32>
    %210 = math.tanh %209 : vector<2x16xf32>
    %211 = arith.mulf %207, %176 : vector<2x16xf32>
    %212 = arith.mulf %206, %210 : vector<2x16xf32>
    %213 = arith.addf %211, %212 : vector<2x16xf32>
    %214 = math.tanh %213 : vector<2x16xf32>
    %215 = arith.mulf %208, %214 : vector<2x16xf32>
    %216 = tpu.concatenate %215, %197 in 1 : vector<2x16xf32>, vector<2x16xf32> -> vector<2x32xf32>
    %cst_37 = arith.constant dense<0.000000e+00> : vector<2x64xf32>
    %217 = tpu.matmul %216, %3, %cst_37 {dimension_numbers = #tpu.dot_dimension_numbers<[1], [0], [0], [1], [0, 0, 1, 1], [], []>} : vector<2x32xf32>, vector<32x64xf32>, vector<2x64xf32> -> vector<2x64xf32>
    %218 = vector.broadcast %4 : vector<1x64xf32> to vector<2x64xf32>
    %219 = arith.addf %217, %218 : vector<2x64xf32>
    %220 = arith.negf %219 : vector<2x64xf32>
    %221 = math.exp %220 : vector<2x64xf32>
    %cst_38 = arith.constant 1.000000e+00 : f32
    %222 = vector.broadcast %cst_38 : f32 to vector<2x64xf32>
    %223 = arith.addf %222, %221 : vector<2x64xf32>
    %224 = arith.divf %222, %223 : vector<2x64xf32>
    %225 = vector.extract_strided_slice %224 {offsets = [0, 0], sizes = [2, 16], strides = [1, 1]} : vector<2x64xf32> to vector<2x16xf32>
    %226 = vector.extract_strided_slice %224 {offsets = [0, 16], sizes = [2, 16], strides = [1, 1]} : vector<2x64xf32> to vector<2x16xf32>
    %227 = vector.extract_strided_slice %224 {offsets = [0, 48], sizes = [2, 16], strides = [1, 1]} : vector<2x64xf32> to vector<2x16xf32>
    %228 = vector.extract_strided_slice %219 {offsets = [0, 32], sizes = [2, 16], strides = [1, 1]} : vector<2x64xf32> to vector<2x16xf32>
    %229 = math.tanh %228 : vector<2x16xf32>
    %230 = arith.mulf %226, %195 : vector<2x16xf32>
    %231 = arith.mulf %225, %229 : vector<2x16xf32>
    %232 = arith.addf %230, %231 : vector<2x16xf32>
    %233 = math.tanh %232 : vector<2x16xf32>
    %234 = arith.mulf %227, %233 : vector<2x16xf32>
    %235 = vector.extract_strided_slice %8 {offsets = [12, 0], sizes = [2, 64], strides = [1, 1]} : vector<16x64xf32> to vector<2x64xf32>
    %cst_39 = arith.constant dense<0.000000e+00> : vector<2x64xf32>
    %236 = tpu.matmul %215, %1, %cst_39 {dimension_numbers = #tpu.dot_dimension_numbers<[1], [0], [0], [1], [0, 0, 1, 1], [], []>} : vector<2x16xf32>, vector<16x64xf32>, vector<2x64xf32> -> vector<2x64xf32>
    %237 = arith.addf %235, %236 : vector<2x64xf32>
    %238 = arith.negf %237 : vector<2x64xf32>
    %239 = math.exp %238 : vector<2x64xf32>
    %cst_40 = arith.constant 1.000000e+00 : f32
    %240 = vector.broadcast %cst_40 : f32 to vector<2x64xf32>
    %241 = arith.addf %240, %239 : vector<2x64xf32>
    %242 = arith.divf %240, %241 : vector<2x64xf32>
    %243 = vector.extract_strided_slice %242 {offsets = [0, 0], sizes = [2, 16], strides = [1, 1]} : vector<2x64xf32> to vector<2x16xf32>
    %244 = vector.extract_strided_slice %242 {offsets = [0, 16], sizes = [2, 16], strides = [1, 1]} : vector<2x64xf32> to vector<2x16xf32>
    %245 = vector.extract_strided_slice %242 {offsets = [0, 48], sizes = [2, 16], strides = [1, 1]} : vector<2x64xf32> to vector<2x16xf32>
    %246 = vector.extract_strided_slice %237 {offsets = [0, 32], sizes = [2, 16], strides = [1, 1]} : vector<2x64xf32> to vector<2x16xf32>
    %247 = math.tanh %246 : vector<2x16xf32>
    %248 = arith.mulf %244, %213 : vector<2x16xf32>
    %249 = arith.mulf %243, %247 : vector<2x16xf32>
    %250 = arith.addf %248, %249 : vector<2x16xf32>
    %251 = math.tanh %250 : vector<2x16xf32>
    %252 = arith.mulf %245, %251 : vector<2x16xf32>
    %253 = tpu.concatenate %252, %234 in 1 : vector<2x16xf32>, vector<2x16xf32> -> vector<2x32xf32>
    %cst_41 = arith.constant dense<0.000000e+00> : vector<2x64xf32>
    %254 = tpu.matmul %253, %3, %cst_41 {dimension_numbers = #tpu.dot_dimension_numbers<[1], [0], [0], [1], [0, 0, 1, 1], [], []>} : vector<2x32xf32>, vector<32x64xf32>, vector<2x64xf32> -> vector<2x64xf32>
    %255 = vector.broadcast %4 : vector<1x64xf32> to vector<2x64xf32>
    %256 = arith.addf %254, %255 : vector<2x64xf32>
    %257 = arith.negf %256 : vector<2x64xf32>
    %258 = math.exp %257 : vector<2x64xf32>
    %cst_42 = arith.constant 1.000000e+00 : f32
    %259 = vector.broadcast %cst_42 : f32 to vector<2x64xf32>
    %260 = arith.addf %259, %258 : vector<2x64xf32>
    %261 = arith.divf %259, %260 : vector<2x64xf32>
    %262 = vector.extract_strided_slice %261 {offsets = [0, 0], sizes = [2, 16], strides = [1, 1]} : vector<2x64xf32> to vector<2x16xf32>
    %263 = vector.extract_strided_slice %261 {offsets = [0, 16], sizes = [2, 16], strides = [1, 1]} : vector<2x64xf32> to vector<2x16xf32>
    %264 = vector.extract_strided_slice %261 {offsets = [0, 48], sizes = [2, 16], strides = [1, 1]} : vector<2x64xf32> to vector<2x16xf32>
    %265 = vector.extract_strided_slice %256 {offsets = [0, 32], sizes = [2, 16], strides = [1, 1]} : vector<2x64xf32> to vector<2x16xf32>
    %266 = math.tanh %265 : vector<2x16xf32>
    %267 = arith.mulf %263, %232 : vector<2x16xf32>
    %268 = arith.mulf %262, %266 : vector<2x16xf32>
    %269 = arith.addf %267, %268 : vector<2x16xf32>
    %270 = math.tanh %269 : vector<2x16xf32>
    %271 = arith.mulf %264, %270 : vector<2x16xf32>
    %272 = vector.extract_strided_slice %8 {offsets = [14, 0], sizes = [2, 64], strides = [1, 1]} : vector<16x64xf32> to vector<2x64xf32>
    %cst_43 = arith.constant dense<0.000000e+00> : vector<2x64xf32>
    %273 = tpu.matmul %252, %1, %cst_43 {dimension_numbers = #tpu.dot_dimension_numbers<[1], [0], [0], [1], [0, 0, 1, 1], [], []>} : vector<2x16xf32>, vector<16x64xf32>, vector<2x64xf32> -> vector<2x64xf32>
    %274 = arith.addf %272, %273 : vector<2x64xf32>
    %275 = arith.negf %274 : vector<2x64xf32>
    %276 = math.exp %275 : vector<2x64xf32>
    %cst_44 = arith.constant 1.000000e+00 : f32
    %277 = vector.broadcast %cst_44 : f32 to vector<2x64xf32>
    %278 = arith.addf %277, %276 : vector<2x64xf32>
    %279 = arith.divf %277, %278 : vector<2x64xf32>
    %280 = vector.extract_strided_slice %279 {offsets = [0, 0], sizes = [2, 16], strides = [1, 1]} : vector<2x64xf32> to vector<2x16xf32>
    %281 = vector.extract_strided_slice %279 {offsets = [0, 16], sizes = [2, 16], strides = [1, 1]} : vector<2x64xf32> to vector<2x16xf32>
    %282 = vector.extract_strided_slice %279 {offsets = [0, 48], sizes = [2, 16], strides = [1, 1]} : vector<2x64xf32> to vector<2x16xf32>
    %283 = vector.extract_strided_slice %274 {offsets = [0, 32], sizes = [2, 16], strides = [1, 1]} : vector<2x64xf32> to vector<2x16xf32>
    %284 = math.tanh %283 : vector<2x16xf32>
    %285 = arith.mulf %281, %250 : vector<2x16xf32>
    %286 = arith.mulf %280, %284 : vector<2x16xf32>
    %287 = arith.addf %285, %286 : vector<2x16xf32>
    %288 = math.tanh %287 : vector<2x16xf32>
    %289 = arith.mulf %282, %288 : vector<2x16xf32>
    %290 = tpu.concatenate %289, %271 in 1 : vector<2x16xf32>, vector<2x16xf32> -> vector<2x32xf32>
    %cst_45 = arith.constant dense<0.000000e+00> : vector<2x64xf32>
    %291 = tpu.matmul %290, %3, %cst_45 {dimension_numbers = #tpu.dot_dimension_numbers<[1], [0], [0], [1], [0, 0, 1, 1], [], []>} : vector<2x32xf32>, vector<32x64xf32>, vector<2x64xf32> -> vector<2x64xf32>
    %292 = vector.broadcast %4 : vector<1x64xf32> to vector<2x64xf32>
    %293 = arith.addf %291, %292 : vector<2x64xf32>
    %294 = arith.negf %293 : vector<2x64xf32>
    %295 = math.exp %294 : vector<2x64xf32>
    %cst_46 = arith.constant 1.000000e+00 : f32
    %296 = vector.broadcast %cst_46 : f32 to vector<2x64xf32>
    %297 = arith.addf %296, %295 : vector<2x64xf32>
    %298 = arith.divf %296, %297 : vector<2x64xf32>
    %299 = vector.extract_strided_slice %298 {offsets = [0, 0], sizes = [2, 16], strides = [1, 1]} : vector<2x64xf32> to vector<2x16xf32>
    %300 = vector.extract_strided_slice %298 {offsets = [0, 16], sizes = [2, 16], strides = [1, 1]} : vector<2x64xf32> to vector<2x16xf32>
    %301 = vector.extract_strided_slice %298 {offsets = [0, 48], sizes = [2, 16], strides = [1, 1]} : vector<2x64xf32> to vector<2x16xf32>
    %302 = vector.extract_strided_slice %293 {offsets = [0, 32], sizes = [2, 16], strides = [1, 1]} : vector<2x64xf32> to vector<2x16xf32>
    %303 = math.tanh %302 : vector<2x16xf32>
    %304 = arith.mulf %300, %269 : vector<2x16xf32>
    %305 = arith.mulf %299, %303 : vector<2x16xf32>
    %306 = arith.addf %304, %305 : vector<2x16xf32>
    %307 = math.tanh %306 : vector<2x16xf32>
    %308 = arith.mulf %301, %307 : vector<2x16xf32>
    %c0_47 = arith.constant 0 : index
    %c0_48 = arith.constant 0 : index
    %309 = vector.load %arg6[%c0_47, %c0_48] : memref<16x2xf32, #tpu.memory_space<vmem>>, vector<16x2xf32>
    %cst_49 = arith.constant dense<0.000000e+00> : vector<2x2xf32>
    %310 = tpu.matmul %308, %309, %cst_49 {dimension_numbers = #tpu.dot_dimension_numbers<[1], [0], [0], [1], [0, 0, 1, 1], [], []>} : vector<2x16xf32>, vector<16x2xf32>, vector<2x2xf32> -> vector<2x2xf32>
    %c0_50 = arith.constant 0 : index
    %c0_51 = arith.constant 0 : index
    %311 = vector.load %arg7[%c0_50, %c0_51] : memref<1x2xf32, #tpu.memory_space<vmem>>, vector<1x2xf32>
    %312 = vector.broadcast %311 : vector<1x2xf32> to vector<2x2xf32>
    %313 = arith.addf %310, %312 : vector<2x2xf32>
    %c0_52 = arith.constant 0 : index
    %c0_53 = arith.constant 0 : index
    %314 = vector.load %arg8[%c0_52, %c0_53] : memref<2x2xf32, #tpu.memory_space<vmem>>, vector<2x2xf32>
    tpu.vector_store %arg8[%c0_52, %c0_53], %313 {strides = array<i32>} : memref<2x2xf32, #tpu.memory_space<vmem>>, vector<2x2xf32>,
    return
  }
}

</mosaic_0001>

<llo_original>
// kernel: tpu_custom_call.1
$region0: #{tpu_custom_call.1}
  #allocation0 [shape = 'u32[]', space=smem, size = 0x4, offset = 0x4, fixed_abs, tag = 'smem constant byte address 0x4 - core index']
  #allocation1 [shape = 'u32[144,128]{1,0:T(1,128)}', space=vmem, size = 0x12000, scoped, tag = 'internal scratch']
  %s0 = inlined_call_operand.vmem [shape: f32[16,64], index: 0, kind: input, shape index: {}]
  %s1 = inlined_call_operand.hbm [shape: f32[64,64], index: 1, kind: input, shape index: {}]
  %s2 = inlined_call_operand.hbm [shape: f32[16,64], index: 2, kind: input, shape index: {}]
  %s3 = inlined_call_operand.vmem [shape: f32[1,64], index: 3, kind: input, shape index: {}]
  %s4 = inlined_call_operand.hbm [shape: f32[32,64], index: 4, kind: input, shape index: {}]
  %s5 = inlined_call_operand.vmem [shape: f32[1,64], index: 5, kind: input, shape index: {}]
  %s6 = inlined_call_operand.vmem [shape: f32[16,2], index: 6, kind: input, shape index: {}]
  %s7 = inlined_call_operand.vmem [shape: f32[1,2], index: 7, kind: input, shape index: {}]
  %s8 = inlined_call_operand.hbm [shape: f32[2,2], index: 8, kind: output, shape index: {}]
  %s9 = sld [smem:[#allocation0]]
  $region54: #{tpu_custom_call.1} parent=0
    _
  %s11 = ssub.s32 1, %s9
  %s12 = scalar_select 0, %s11, %s9
  $region1: #{tpu_custom_call.1} parent=0
    #allocation2 [shape = 'u8[32768]{0}', space=vmem, size = 0x8000, scoped, tag = 'input window, operand 1, single buffered']
    #allocation3 [shape = 's32[1]{0}', space=sflag, size = 0x4, scoped, tag = 'scoped memory for tpu_custom_call.1']
    #allocation4 [shape = 's32[1]{0}', space=sflag, size = 0x4, scoped, tag = 'scoped memory for tpu_custom_call.1']
    #allocation5 [shape = 'u8[8192]{0}', space=vmem, size = 0x2000, scoped, tag = 'input window, operand 2, single buffered']
    #allocation6 [shape = 's32[1]{0}', space=sflag, size = 0x4, scoped, tag = 'scoped memory for tpu_custom_call.1']
    #allocation7 [shape = 'u8[16384]{0}', space=vmem, size = 0x4000, scoped, tag = 'input window, operand 4, single buffered']
    #allocation8 [shape = 'u8[1024]{0}', space=vmem, size = 0x400, scoped, tag = 'output window, operand 0, single buffered']
    %13 = vsyncpa [#allocation3], 0
    %14 = vsyncpa [#allocation6], 0
    %15 = vsyncpa [#allocation4], 0
    // Predicated region
    $region2: #{tpu_custom_call.1} parent=1 // pred_check
      _
    $region3: #{tpu_custom_call.1} parent=1 // pred_check_branch
      %17 = sbr.rel (0) target = $region5
    $region4: #{tpu_custom_call.1} parent=1 // pred_region
      _
    $region5: #{tpu_custom_call.1} parent=1 // pred_fallthru
      _
    // Predicated region
    $region6: #{tpu_custom_call.1} parent=1 // pred_check
      _
    $region7: #{tpu_custom_call.1} parent=1 // pred_check_branch
      %19 = sbr.rel (0) target = $region9
    $region8: #{tpu_custom_call.1} parent=1 // pred_region
      %s21 = ssub.s32 1024, 1024
      %22 = vsyncadd [#allocation3], %s21
      %s23 = sshll.u32 [#allocation2], 4
      %s24 = int_to_ptr.vmem [resolvable:$true] %s23
      %29 = dma.hbm_to_vmem [thread:$0]  %s1, 1024, %s24, [#allocation3], 128, 128, 8
    $region9: #{tpu_custom_call.1} parent=1 // pred_fallthru
      _
    // Predicated region
    $region10: #{tpu_custom_call.1} parent=1 // pred_check
      _
    $region11: #{tpu_custom_call.1} parent=1 // pred_check_branch
      %31 = sbr.rel (0) target = $region13
    $region12: #{tpu_custom_call.1} parent=1 // pred_region
      %s33 = ssub.s32 256, 256
      %34 = vsyncadd [#allocation6], %s33
      %s35 = sshll.u32 [#allocation5], 4
      %s36 = int_to_ptr.vmem [resolvable:$true] %s35
      %41 = dma.hbm_to_vmem [thread:$0]  %s2, 256, %s36, [#allocation6], 128, 128, 8
    $region13: #{tpu_custom_call.1} parent=1 // pred_fallthru
      _
    // Predicated region
    $region14: #{tpu_custom_call.1} parent=1 // pred_check
      _
    $region15: #{tpu_custom_call.1} parent=1 // pred_check_branch
      %43 = sbr.rel (0) target = $region17
    $region16: #{tpu_custom_call.1} parent=1 // pred_region
      _
    $region17: #{tpu_custom_call.1} parent=1 // pred_fallthru
      _
    // Predicated region
    $region18: #{tpu_custom_call.1} parent=1 // pred_check
      _
    $region19: #{tpu_custom_call.1} parent=1 // pred_check_branch
      %45 = sbr.rel (0) target = $region21
    $region20: #{tpu_custom_call.1} parent=1 // pred_region
      %s47 = ssub.s32 512, 512
      %48 = vsyncadd [#allocation6], %s47
      %s49 = sshll.u32 [#allocation7], 4
      %s50 = int_to_ptr.vmem [resolvable:$true] %s49
      %55 = dma.hbm_to_vmem [thread:$0]  %s4, 512, %s50, [#allocation6], 128, 128, 8
    $region21: #{tpu_custom_call.1} parent=1 // pred_fallthru
      _
    // Predicated region
    $region22: #{tpu_custom_call.1} parent=1 // pred_check
      _
    $region23: #{tpu_custom_call.1} parent=1 // pred_check_branch
      %57 = sbr.rel (0) target = $region25
    $region24: #{tpu_custom_call.1} parent=1 // pred_region
      _
    $region25: #{tpu_custom_call.1} parent=1 // pred_fallthru
      _
    // Predicated region
    $region26: #{tpu_custom_call.1} parent=1 // pred_check
      _
    $region27: #{tpu_custom_call.1} parent=1 // pred_check_branch
      %59 = sbr.rel (0) target = $region29
    $region28: #{tpu_custom_call.1} parent=1 // pred_region
      _
    $region29: #{tpu_custom_call.1} parent=1 // pred_fallthru
      _
    // Predicated region
    $region30: #{tpu_custom_call.1} parent=1 // pred_check
      _
    $region31: #{tpu_custom_call.1} parent=1 // pred_check_branch
      %61 = sbr.rel (0) target = $region33
    $region32: #{tpu_custom_call.1} parent=1 // pred_region
      _
    $region33: #{tpu_custom_call.1} parent=1 // pred_fallthru
      _
    // Predicated region
    $region34: #{tpu_custom_call.1} parent=1 // pred_check
      _
    $region35: #{tpu_custom_call.1} parent=1 // pred_check_branch
      %63 = sbr.rel (0) target = $region37
    $region36: #{tpu_custom_call.1} parent=1 // pred_region
      %64 = dma.done [#allocation3], 1024
    $region37: #{tpu_custom_call.1} parent=1 // pred_fallthru
      _
    // Predicated region
    $region38: #{tpu_custom_call.1} parent=1 // pred_check
      _
    $region39: #{tpu_custom_call.1} parent=1 // pred_check_branch
      %66 = sbr.rel (0) target = $region41
    $region40: #{tpu_custom_call.1} parent=1 // pred_region
      %67 = dma.done [#allocation6], 256
    $region41: #{tpu_custom_call.1} parent=1 // pred_fallthru
      _
    // Predicated region
    $region42: #{tpu_custom_call.1} parent=1 // pred_check
      _
    $region43: #{tpu_custom_call.1} parent=1 // pred_check_branch
      %69 = sbr.rel (0) target = $region45
    $region44: #{tpu_custom_call.1} parent=1 // pred_region
      %70 = dma.done [#allocation6], 512
    $region45: #{tpu_custom_call.1} parent=1 // pred_fallthru
      _
    %v71 = vld [vmem:[#allocation2] sm:$0xff]
    %v72 = vld [vmem:[#allocation2 + $0x8] sm:$0xff]
    %v73 = vld [vmem:[#allocation2 + $0x10] sm:$0xff]
    %v74 = vld [vmem:[#allocation2 + $0x18] sm:$0xff]
    %v75 = vld [vmem:[#allocation2 + $0x20] sm:$0xff]
    %v76 = vld [vmem:[#allocation2 + $0x28] sm:$0xff]
    %v77 = vld [vmem:[#allocation2 + $0x30] sm:$0xff]
    %v78 = vld [vmem:[#allocation2 + $0x38] sm:$0xff]
    %v79 = vld [vmem:[#allocation5] sm:$0xff]
    %v80 = vld [vmem:[#allocation5 + $0x8] sm:$0xff]
    %v81 = vld [vmem:[%s3] sm:$0x1]
    %v82 = vld [vmem:[#allocation7] sm:$0xff]
    %v83 = vld [vmem:[#allocation7 + $0x8] sm:$0xff]
    %v84 = vld [vmem:[#allocation7 + $0x10] sm:$0xff]
    %v85 = vld [vmem:[#allocation7 + $0x18] sm:$0xff]
    %v86 = vld [vmem:[%s5] sm:$0x1]
    %v87 = vld [vmem:[%s0] sm:$0xff]
    %v88 = vld [vmem:[%s0 + $0x8] sm:$0xff]
    %v90 = vlaneseq
    %v91 = vshrl.u32 %v90, 7
    %v92 = vsub.s32 0, %v91
    %v93 = vrot.slane %v81, %v92
    %vm95 = vcmask 523264
    %v97 = vsel %vm95, %v87, 0
    %v100 = vsel %vm95, %v88, 0
    %102 = vmatprep.subr.mxu0 0.0
    %103 = vmatpush1.msra.mxu0 0.0
    %104 = vmatprep.subr.mxu0 0.0
    %105 = vmatpush1.msra.mxu0 0.0
    %106 = vmatprep.subr.mxu0 0.0
    %107 = vmatpush1.msra.mxu0 0.0
    %108 = vmatprep.subr.mxu0 0.0
    %109 = vmatpush1.msra.mxu0 0.0
    %110 = vmatprep.subr.mxu0 0.0
    %111 = vmatpush1.msra.mxu0 0.0
    %112 = vmatprep.subr.mxu0 0.0
    %113 = vmatpush1.msra.mxu0 0.0
    %114 = vmatprep.subr.mxu0 0.0
    %115 = vmatpush1.msra.mxu0 0.0
    %116 = vmatprep.subr.mxu0 0.0
    %117 = vmatpush1.msra.mxu0 0.0
    %118 = vmatprep.subr.mxu0 0.0
    %119 = vmatpush1.msra.mxu0 %v78
    %120 = vmatprep.subr.mxu0 0.0
    %121 = vmatpush1.msra.mxu0 %v77
    %122 = vmatprep.subr.mxu0 0.0
    %123 = vmatpush1.msra.mxu0 %v76
    %124 = vmatprep.subr.mxu0 0.0
    %125 = vmatpush1.msra.mxu0 %v75
    %126 = vmatprep.subr.mxu0 0.0
    %127 = vmatpush1.msra.mxu0 %v74
    %128 = vmatprep.subr.mxu0 0.0
    %129 = vmatpush1.msra.mxu0 %v73
    %130 = vmatprep.subr.mxu0 0.0
    %131 = vmatpush1.msra.mxu0 %v72
    %132 = vmatprep.subr.mxu0 0.0
    %133 = vmatpush1.msra.mxu0 %v71
    %134 = vmatprep.subr.mxu0 0.0
    %135 = vmatpush2.msra.mxu0 0.0
    %136 = vmatprep.subr.mxu0 0.0
    %137 = vmatpush2.msra.mxu0 0.0
    %138 = vmatprep.subr.mxu0 0.0
    %139 = vmatpush2.msra.mxu0 0.0
    %140 = vmatprep.subr.mxu0 0.0
    %141 = vmatpush2.msra.mxu0 0.0
    %142 = vmatprep.subr.mxu0 0.0
    %143 = vmatpush2.msra.mxu0 0.0
    %144 = vmatprep.subr.mxu0 0.0
    %145 = vmatpush2.msra.mxu0 0.0
    %146 = vmatprep.subr.mxu0 0.0
    %147 = vmatpush2.msra.mxu0 0.0
    %148 = vmatprep.subr.mxu0 0.0
    %149 = vmatpush2.msra.mxu0 0.0
    %150 = vmatprep.subr.mxu0 0.0
    %151 = vmatpush2.msra.mxu0 0.0
    %152 = vmatprep.subr.mxu0 0.0
    %153 = vmatpush2.msra.mxu0 0.0
    %154 = vmatprep.subr.mxu0 0.0
    %155 = vmatpush2.msra.mxu0 0.0
    %156 = vmatprep.subr.mxu0 0.0
    %157 = vmatpush2.msra.mxu0 0.0
    %158 = vmatprep.subr.mxu0 0.0
    %159 = vmatpush2.msra.mxu0 0.0
    %160 = vmatprep.subr.mxu0 0.0
    %161 = vmatpush2.msra.mxu0 0.0
    %162 = vmatprep.subr.mxu0 0.0
    %163 = vmatpush2.msra.mxu0 0.0
    %164 = vmatprep.subr.mxu0 0.0
    %165 = vmatpush2.msra.mxu0 0.0
    %166 = vmatprep.mubr.f32.mxu0 0.0
    %167 = vmatmul.mubr.f32.gmra.mxu0 %v97
    %v168 = vpop.f32.mrf.mxu0
    %v169 = vadd.f32 %v93, %v168
    %v170 = vpop.f32.mrf.mxu0
    %171 = vmatprep.mubr.f32.mxu0 0.0
    %172 = vmatmul.mubr.f32.gmra.mxu0 %v100
    %v173 = vpop.f32.mrf.mxu0
    %v174 = vadd.f32 %v93, %v173
    %v175 = vpop.f32.mrf.mxu0
    %176 = vdwg.mxu0
    %vm177 = vcmask 130048
    %v179 = vsel %vm177, 0.0, 0
    %181 = vmatprep.subr.mxu0 0.0
    %182 = vmatpush1.msra.mxu0 0.0
    %183 = vmatprep.subr.mxu0 0.0
    %184 = vmatpush1.msra.mxu0 0.0
    %185 = vmatprep.subr.mxu0 0.0
    %186 = vmatpush1.msra.mxu0 0.0
    %187 = vmatprep.subr.mxu0 0.0
    %188 = vmatpush1.msra.mxu0 0.0
    %189 = vmatprep.subr.mxu0 0.0
    %190 = vmatpush1.msra.mxu0 0.0
    %191 = vmatprep.subr.mxu0 0.0
    %192 = vmatpush1.msra.mxu0 0.0
    %193 = vmatprep.subr.mxu0 0.0
    %194 = vmatpush1.msra.mxu0 0.0
    %195 = vmatprep.subr.mxu0 0.0
    %196 = vmatpush1.msra.mxu0 0.0
    %197 = vmatprep.subr.mxu0 0.0
    %198 = vmatpush1.msra.mxu0 0.0
    %199 = vmatprep.subr.mxu0 0.0
    %200 = vmatpush1.msra.mxu0 0.0
    %201 = vmatprep.subr.mxu0 0.0
    %202 = vmatpush1.msra.mxu0 0.0
    %203 = vmatprep.subr.mxu0 0.0
    %204 = vmatpush1.msra.mxu0 0.0
    %205 = vmatprep.subr.mxu0 0.0
    %206 = vmatpush1.msra.mxu0 0.0
    %207 = vmatprep.subr.mxu0 0.0
    %208 = vmatpush1.msra.mxu0 0.0
    %209 = vmatprep.subr.mxu0 0.0
    %210 = vmatpush1.msra.mxu0 %v80
    %211 = vmatprep.subr.mxu0 0.0
    %212 = vmatpush1.msra.mxu0 %v79
    %213 = vmatprep.subr.mxu0 0.0
    %214 = vmatpush2.msra.mxu0 0.0
    %215 = vmatprep.subr.mxu0 0.0
    %216 = vmatpush2.msra.mxu0 0.0
    %217 = vmatprep.subr.mxu0 0.0
    %218 = vmatpush2.msra.mxu0 0.0
    %219 = vmatprep.subr.mxu0 0.0
    %220 = vmatpush2.msra.mxu0 0.0
    %221 = vmatprep.subr.mxu0 0.0
    %222 = vmatpush2.msra.mxu0 0.0
    %223 = vmatprep.subr.mxu0 0.0
    %224 = vmatpush2.msra.mxu0 0.0
    %225 = vmatprep.subr.mxu0 0.0
    %226 = vmatpush2.msra.mxu0 0.0
    %227 = vmatprep.subr.mxu0 0.0
    %228 = vmatpush2.msra.mxu0 0.0
    %229 = vmatprep.subr.mxu0 0.0
    %230 = vmatpush2.msra.mxu0 0.0
    %231 = vmatprep.subr.mxu0 0.0
    %232 = vmatpush2.msra.mxu0 0.0
    %233 = vmatprep.subr.mxu0 0.0
    %234 = vmatpush2.msra.mxu0 0.0
    %235 = vmatprep.subr.mxu0 0.0
    %236 = vmatpush2.msra.mxu0 0.0
    %237 = vmatprep.subr.mxu0 0.0
    %238 = vmatpush2.msra.mxu0 0.0
    %239 = vmatprep.subr.mxu0 0.0
    %240 = vmatpush2.msra.mxu0 0.0
    %241 = vmatprep.subr.mxu0 0.0
    %242 = vmatpush2.msra.mxu0 0.0
    %243 = vmatprep.subr.mxu0 0.0
    %244 = vmatpush2.msra.mxu0 0.0
    %245 = vmatprep.mubr.f32.mxu0 0.0
    %246 = vmatmul.mubr.f32.gmra.mxu0 %v179
    %v247 = vpop.f32.mrf.mxu0
    %v248 = vadd.f32 0.0, %v247
    %v249 = vpop.f32.mrf.mxu0
    %250 = vdwg.mxu0
    %v251 = vadd.f32 %v169, %v248
    %v252 = vxor.u32 %v251, 2147483648
    %v253 = vmul.f32 %v252, 1.442695
    %v254 = vpow.pop %v253
    %v255 = vadd.f32 %v254, 1.0
    %v256 = vrcp.pop %v255
    %v257 = vmul.f32 1.0, %v256
    %v258 = vtanh.pop %v251
    %v259 = vmul.f32 %v257, 0.0
    %261 = vrot.lane.b32.xlu0 %v258, 96
    %v262 = vpop.permute.xlu0 %261
    %v264 = vmul.f32 %v257, %v262
    %266 = vrot.lane.b32.xlu0 %v264, 16
    %v267 = vpop.permute.xlu0 %266
    %v269 = vadd.f32 %v259, %v267
    %v270 = vtanh.pop %v269
    %272 = vrot.lane.b32.xlu0 %v270, 32
    %v273 = vpop.permute.xlu0 %272
    %v275 = vmul.f32 %v257, %v273
    %277 = vrot.lane.b32.xlu0 %v275, 80
    %v278 = vpop.permute.xlu0 %277
    %v280 = vsel %vm177, %v278, 0.0
    %v282 = vlaneseq
    %v283 = vshrl.u32 %v282, 7
    %v284 = vsub.s32 0, %v283
    %v285 = vrot.slane %v86, %v284
    %vm287 = vcmask 261120
    %v289 = vsel %vm287, %v280, 0
    %291 = vmatprep.subr.mxu0 0.0
    %292 = vmatpush1.msra.mxu0 0.0
    %293 = vmatprep.subr.mxu0 0.0
    %294 = vmatpush1.msra.mxu0 0.0
    %295 = vmatprep.subr.mxu0 0.0
    %296 = vmatpush1.msra.mxu0 0.0
    %297 = vmatprep.subr.mxu0 0.0
    %298 = vmatpush1.msra.mxu0 0.0
    %299 = vmatprep.subr.mxu0 0.0
    %300 = vmatpush1.msra.mxu0 0.0
    %301 = vmatprep.subr.mxu0 0.0
    %302 = vmatpush1.msra.mxu0 0.0
    %303 = vmatprep.subr.mxu0 0.0
    %304 = vmatpush1.msra.mxu0 0.0
    %305 = vmatprep.subr.mxu0 0.0
    %306 = vmatpush1.msra.mxu0 0.0
    %307 = vmatprep.subr.mxu0 0.0
    %308 = vmatpush1.msra.mxu0 0.0
    %309 = vmatprep.subr.mxu0 0.0
    %310 = vmatpush1.msra.mxu0 0.0
    %311 = vmatprep.subr.mxu0 0.0
    %312 = vmatpush1.msra.mxu0 0.0
    %313 = vmatprep.subr.mxu0 0.0
    %314 = vmatpush1.msra.mxu0 0.0
    %315 = vmatprep.subr.mxu0 0.0
    %316 = vmatpush1.msra.mxu0 %v85
    %317 = vmatprep.subr.mxu0 0.0
    %318 = vmatpush1.msra.mxu0 %v84
    %319 = vmatprep.subr.mxu0 0.0
    %320 = vmatpush1.msra.mxu0 %v83
    %321 = vmatprep.subr.mxu0 0.0
    %322 = vmatpush1.msra.mxu0 %v82
    %323 = vmatprep.subr.mxu0 0.0
    %324 = vmatpush2.msra.mxu0 0.0
    %325 = vmatprep.subr.mxu0 0.0
    %326 = vmatpush2.msra.mxu0 0.0
    %327 = vmatprep.subr.mxu0 0.0
    %328 = vmatpush2.msra.mxu0 0.0
    %329 = vmatprep.subr.mxu0 0.0
    %330 = vmatpush2.msra.mxu0 0.0
    %331 = vmatprep.subr.mxu0 0.0
    %332 = vmatpush2.msra.mxu0 0.0
    %333 = vmatprep.subr.mxu0 0.0
    %334 = vmatpush2.msra.mxu0 0.0
    %335 = vmatprep.subr.mxu0 0.0
    %336 = vmatpush2.msra.mxu0 0.0
    %337 = vmatprep.subr.mxu0 0.0
    %338 = vmatpush2.msra.mxu0 0.0
    %339 = vmatprep.subr.mxu0 0.0
    %340 = vmatpush2.msra.mxu0 0.0
    %341 = vmatprep.subr.mxu0 0.0
    %342 = vmatpush2.msra.mxu0 0.0
    %343 = vmatprep.subr.mxu0 0.0
    %344 = vmatpush2.msra.mxu0 0.0
    %345 = vmatprep.subr.mxu0 0.0
    %346 = vmatpush2.msra.mxu0 0.0
    %347 = vmatprep.subr.mxu0 0.0
    %348 = vmatpush2.msra.mxu0 0.0
    %349 = vmatprep.subr.mxu0 0.0
    %350 = vmatpush2.msra.mxu0 0.0
    %351 = vmatprep.subr.mxu0 0.0
    %352 = vmatpush2.msra.mxu0 0.0
    %353 = vmatprep.subr.mxu0 0.0
    %354 = vmatpush2.msra.mxu0 0.0
    %355 = vmatprep.mubr.f32.mxu0 0.0
    %356 = vmatmul.mubr.f32.gmra.mxu0 %v289
    %v357 = vpop.f32.mrf.mxu0
    %v358 = vadd.f32 %v285, %v357
    %v359 = vpop.f32.mrf.mxu0
    %360 = vdwg.mxu0
    %v361 = vxor.u32 %v358, 2147483648
    %v362 = vmul.f32 %v361, 1.442695
    %v363 = vpow.pop %v362
    %v364 = vadd.f32 %v363, 1.0
    %v365 = vrcp.pop %v364
    %v366 = vmul.f32 1.0, %v365
    %v367 = vtanh.pop %v358
    %v368 = vmul.f32 %v366, 0.0
    %370 = vrot.lane.b32.xlu0 %v367, 96
    %v371 = vpop.permute.xlu0 %370
    %v373 = vmul.f32 %v366, %v371
    %375 = vrot.lane.b32.xlu0 %v373, 16
    %v376 = vpop.permute.xlu0 %375
    %v378 = vadd.f32 %v368, %v376
    %v379 = vtanh.pop %v378
    %381 = vrot.lane.b32.xlu0 %v379, 32
    %v382 = vpop.permute.xlu0 %381
    %v384 = vmul.f32 %v366, %v382
    %v385 = vsel %vm177, %v278, 0
    %387 = vmatprep.subr.mxu0 0.0
    %388 = vmatpush1.msra.mxu0 0.0
    %389 = vmatprep.subr.mxu0 0.0
    %390 = vmatpush1.msra.mxu0 0.0
    %391 = vmatprep.subr.mxu0 0.0
    %392 = vmatpush1.msra.mxu0 0.0
    %393 = vmatprep.subr.mxu0 0.0
    %394 = vmatpush1.msra.mxu0 0.0
    %395 = vmatprep.subr.mxu0 0.0
    %396 = vmatpush1.msra.mxu0 0.0
    %397 = vmatprep.subr.mxu0 0.0
    %398 = vmatpush1.msra.mxu0 0.0
    %399 = vmatprep.subr.mxu0 0.0
    %400 = vmatpush1.msra.mxu0 0.0
    %401 = vmatprep.subr.mxu0 0.0
    %402 = vmatpush1.msra.mxu0 0.0
    %403 = vmatprep.subr.mxu0 0.0
    %404 = vmatpush1.msra.mxu0 0.0
    %405 = vmatprep.subr.mxu0 0.0
    %406 = vmatpush1.msra.mxu0 0.0
    %407 = vmatprep.subr.mxu0 0.0
    %408 = vmatpush1.msra.mxu0 0.0
    %409 = vmatprep.subr.mxu0 0.0
    %410 = vmatpush1.msra.mxu0 0.0
    %411 = vmatprep.subr.mxu0 0.0
    %412 = vmatpush1.msra.mxu0 0.0
    %413 = vmatprep.subr.mxu0 0.0
    %414 = vmatpush1.msra.mxu0 0.0
    %415 = vmatprep.subr.mxu0 0.0
    %416 = vmatpush1.msra.mxu0 %v80
    %417 = vmatprep.subr.mxu0 0.0
    %418 = vmatpush1.msra.mxu0 %v79
    %419 = vmatprep.subr.mxu0 0.0
    %420 = vmatpush2.msra.mxu0 0.0
    %421 = vmatprep.subr.mxu0 0.0
    %422 = vmatpush2.msra.mxu0 0.0
    %423 = vmatprep.subr.mxu0 0.0
    %424 = vmatpush2.msra.mxu0 0.0
    %425 = vmatprep.subr.mxu0 0.0
    %426 = vmatpush2.msra.mxu0 0.0
    %427 = vmatprep.subr.mxu0 0.0
    %428 = vmatpush2.msra.mxu0 0.0
    %429 = vmatprep.subr.mxu0 0.0
    %430 = vmatpush2.msra.mxu0 0.0
    %431 = vmatprep.subr.mxu0 0.0
    %432 = vmatpush2.msra.mxu0 0.0
    %433 = vmatprep.subr.mxu0 0.0
    %434 = vmatpush2.msra.mxu0 0.0
    %435 = vmatprep.subr.mxu0 0.0
    %436 = vmatpush2.msra.mxu0 0.0
    %437 = vmatprep.subr.mxu0 0.0
    %438 = vmatpush2.msra.mxu0 0.0
    %439 = vmatprep.subr.mxu0 0.0
    %440 = vmatpush2.msra.mxu0 0.0
    %441 = vmatprep.subr.mxu0 0.0
    %442 = vmatpush2.msra.mxu0 0.0
    %443 = vmatprep.subr.mxu0 0.0
    %444 = vmatpush2.msra.mxu0 0.0
    %445 = vmatprep.subr.mxu0 0.0
    %446 = vmatpush2.msra.mxu0 0.0
    %447 = vmatprep.subr.mxu0 0.0
    %448 = vmatpush2.msra.mxu0 0.0
    %449 = vmatprep.subr.mxu0 0.0
    %450 = vmatpush2.msra.mxu0 0.0
    %451 = vmatprep.mubr.f32.mxu0 0.0
    %452 = vmatmul.mubr.f32.gmra.mxu0 %v385
    %v453 = vpop.f32.mrf.mxu0
    %v454 = vadd.f32 0.0, %v453
    %v455 = vpop.f32.mrf.mxu0
    %456 = vdwg.mxu0
    %v458 = vrot.slane %v454, 6
    %v460 = vadd.f32 %v169, %v458
    %v461 = vxor.u32 %v460, 2147483648
    %v462 = vmul.f32 %v461, 1.442695
    %v463 = vpow.pop %v462
    %v464 = vadd.f32 %v463, 1.0
    %v465 = vrcp.pop %v464
    %v466 = vmul.f32 1.0, %v465
    %v467 = vtanh.pop %v460
    %v469 = vrot.slane %v269, 6
    %v471 = vmul.f32 %v466, %v469
    %473 = vrot.lane.b32.xlu0 %v467, 96
    %v474 = vpop.permute.xlu0 %473
    %v476 = vmul.f32 %v466, %v474
    %478 = vrot.lane.b32.xlu0 %v476, 16
    %v479 = vpop.permute.xlu0 %478
    %v481 = vadd.f32 %v471, %v479
    %v482 = vtanh.pop %v481
    %484 = vrot.lane.b32.xlu0 %v482, 32
    %v485 = vpop.permute.xlu0 %484
    %v487 = vmul.f32 %v466, %v485
    %489 = vrot.lane.b32.xlu0 %v487, 80
    %v490 = vpop.permute.xlu0 %489
    %v493 = vrot.slane %v384, 6
    %494 = vrot.lane.b32.xlu0 %v493, 96
    %v495 = vpop.permute.xlu0 %494
    %v497 = vsel %vm177, %v490, %v495
    %v499 = vrot.slane %v497, 2
    %v500 = vsel %vm287, %v499, 0
    %502 = vmatprep.subr.mxu0 0.0
    %503 = vmatpush1.msra.mxu0 0.0
    %504 = vmatprep.subr.mxu0 0.0
    %505 = vmatpush1.msra.mxu0 0.0
    %506 = vmatprep.subr.mxu0 0.0
    %507 = vmatpush1.msra.mxu0 0.0
    %508 = vmatprep.subr.mxu0 0.0
    %509 = vmatpush1.msra.mxu0 0.0
    %510 = vmatprep.subr.mxu0 0.0
    %511 = vmatpush1.msra.mxu0 0.0
    %512 = vmatprep.subr.mxu0 0.0
    %513 = vmatpush1.msra.mxu0 0.0
    %514 = vmatprep.subr.mxu0 0.0
    %515 = vmatpush1.msra.mxu0 0.0
    %516 = vmatprep.subr.mxu0 0.0
    %517 = vmatpush1.msra.mxu0 0.0
    %518 = vmatprep.subr.mxu0 0.0
    %519 = vmatpush1.msra.mxu0 0.0
    %520 = vmatprep.subr.mxu0 0.0
    %521 = vmatpush1.msra.mxu0 0.0
    %522 = vmatprep.subr.mxu0 0.0
    %523 = vmatpush1.msra.mxu0 0.0
    %524 = vmatprep.subr.mxu0 0.0
    %525 = vmatpush1.msra.mxu0 0.0
    %526 = vmatprep.subr.mxu0 0.0
    %527 = vmatpush1.msra.mxu0 %v85
    %528 = vmatprep.subr.mxu0 0.0
    %529 = vmatpush1.msra.mxu0 %v84
    %530 = vmatprep.subr.mxu0 0.0
    %531 = vmatpush1.msra.mxu0 %v83
    %532 = vmatprep.subr.mxu0 0.0
    %533 = vmatpush1.msra.mxu0 %v82
    %534 = vmatprep.subr.mxu0 0.0
    %535 = vmatpush2.msra.mxu0 0.0
    %536 = vmatprep.subr.mxu0 0.0
    %537 = vmatpush2.msra.mxu0 0.0
    %538 = vmatprep.subr.mxu0 0.0
    %539 = vmatpush2.msra.mxu0 0.0
    %540 = vmatprep.subr.mxu0 0.0
    %541 = vmatpush2.msra.mxu0 0.0
    %542 = vmatprep.subr.mxu0 0.0
    %543 = vmatpush2.msra.mxu0 0.0
    %544 = vmatprep.subr.mxu0 0.0
    %545 = vmatpush2.msra.mxu0 0.0
    %546 = vmatprep.subr.mxu0 0.0
    %547 = vmatpush2.msra.mxu0 0.0
    %548 = vmatprep.subr.mxu0 0.0
    %549 = vmatpush2.msra.mxu0 0.0
    %550 = vmatprep.subr.mxu0 0.0
    %551 = vmatpush2.msra.mxu0 0.0
    %552 = vmatprep.subr.mxu0 0.0
    %553 = vmatpush2.msra.mxu0 0.0
    %554 = vmatprep.subr.mxu0 0.0
    %555 = vmatpush2.msra.mxu0 0.0
    %556 = vmatprep.subr.mxu0 0.0
    %557 = vmatpush2.msra.mxu0 0.0
    %558 = vmatprep.subr.mxu0 0.0
    %559 = vmatpush2.msra.mxu0 0.0
    %560 = vmatprep.subr.mxu0 0.0
    %561 = vmatpush2.msra.mxu0 0.0
    %562 = vmatprep.subr.mxu0 0.0
    %563 = vmatpush2.msra.mxu0 0.0
    %564 = vmatprep.subr.mxu0 0.0
    %565 = vmatpush2.msra.mxu0 0.0
    %566 = vmatprep.mubr.f32.mxu0 0.0
    %567 = vmatmul.mubr.f32.gmra.mxu0 %v500
    %v568 = vpop.f32.mrf.mxu0
    %v569 = vadd.f32 %v285, %v568
    %v570 = vpop.f32.mrf.mxu0
    %571 = vdwg.mxu0
    %v572 = vxor.u32 %v569, 2147483648
    %v573 = vmul.f32 %v572, 1.442695
    %v574 = vpow.pop %v573
    %v575 = vadd.f32 %v574, 1.0
    %v576 = vrcp.pop %v575
    %v577 = vmul.f32 1.0, %v576
    %v578 = vtanh.pop %v569
    %v579 = vmul.f32 %v577, %v378
    %581 = vrot.lane.b32.xlu0 %v578, 96
    %v582 = vpop.permute.xlu0 %581
    %v584 = vmul.f32 %v577, %v582
    %586 = vrot.lane.b32.xlu0 %v584, 16
    %v587 = vpop.permute.xlu0 %586
    %v589 = vadd.f32 %v579, %v587
    %v590 = vtanh.pop %v589
    %592 = vrot.lane.b32.xlu0 %v590, 32
    %v593 = vpop.permute.xlu0 %592
    %v595 = vmul.f32 %v577, %v593
    %v596 = vrot.slane %v487, 2
    %597 = vrot.lane.b32.xlu0 %v596, 80
    %v598 = vpop.permute.xlu0 %597
    %v599 = vsel %vm177, %v598, 0
    %601 = vmatprep.subr.mxu0 0.0
    %602 = vmatpush1.msra.mxu0 0.0
    %603 = vmatprep.subr.mxu0 0.0
    %604 = vmatpush1.msra.mxu0 0.0
    %605 = vmatprep.subr.mxu0 0.0
    %606 = vmatpush1.msra.mxu0 0.0
    %607 = vmatprep.subr.mxu0 0.0
    %608 = vmatpush1.msra.mxu0 0.0
    %609 = vmatprep.subr.mxu0 0.0
    %610 = vmatpush1.msra.mxu0 0.0
    %611 = vmatprep.subr.mxu0 0.0
    %612 = vmatpush1.msra.mxu0 0.0
    %613 = vmatprep.subr.mxu0 0.0
    %614 = vmatpush1.msra.mxu0 0.0
    %615 = vmatprep.subr.mxu0 0.0
    %616 = vmatpush1.msra.mxu0 0.0
    %617 = vmatprep.subr.mxu0 0.0
    %618 = vmatpush1.msra.mxu0 0.0
    %619 = vmatprep.subr.mxu0 0.0
    %620 = vmatpush1.msra.mxu0 0.0
    %621 = vmatprep.subr.mxu0 0.0
    %622 = vmatpush1.msra.mxu0 0.0
    %623 = vmatprep.subr.mxu0 0.0
    %624 = vmatpush1.msra.mxu0 0.0
    %625 = vmatprep.subr.mxu0 0.0
    %626 = vmatpush1.msra.mxu0 0.0
    %627 = vmatprep.subr.mxu0 0.0
    %628 = vmatpush1.msra.mxu0 0.0
    %629 = vmatprep.subr.mxu0 0.0
    %630 = vmatpush1.msra.mxu0 %v80
    %631 = vmatprep.subr.mxu0 0.0
    %632 = vmatpush1.msra.mxu0 %v79
    %633 = vmatprep.subr.mxu0 0.0
    %634 = vmatpush2.msra.mxu0 0.0
    %635 = vmatprep.subr.mxu0 0.0
    %636 = vmatpush2.msra.mxu0 0.0
    %637 = vmatprep.subr.mxu0 0.0
    %638 = vmatpush2.msra.mxu0 0.0
    %639 = vmatprep.subr.mxu0 0.0
    %640 = vmatpush2.msra.mxu0 0.0
    %641 = vmatprep.subr.mxu0 0.0
    %642 = vmatpush2.msra.mxu0 0.0
    %643 = vmatprep.subr.mxu0 0.0
    %644 = vmatpush2.msra.mxu0 0.0
    %645 = vmatprep.subr.mxu0 0.0
    %646 = vmatpush2.msra.mxu0 0.0
    %647 = vmatprep.subr.mxu0 0.0
    %648 = vmatpush2.msra.mxu0 0.0
    %649 = vmatprep.subr.mxu0 0.0
    %650 = vmatpush2.msra.mxu0 0.0
    %651 = vmatprep.subr.mxu0 0.0
    %652 = vmatpush2.msra.mxu0 0.0
    %653 = vmatprep.subr.mxu0 0.0
    %654 = vmatpush2.msra.mxu0 0.0
    %655 = vmatprep.subr.mxu0 0.0
    %656 = vmatpush2.msra.mxu0 0.0
    %657 = vmatprep.subr.mxu0 0.0
    %658 = vmatpush2.msra.mxu0 0.0
    %659 = vmatprep.subr.mxu0 0.0
    %660 = vmatpush2.msra.mxu0 0.0
    %661 = vmatprep.subr.mxu0 0.0
    %662 = vmatpush2.msra.mxu0 0.0
    %663 = vmatprep.subr.mxu0 0.0
    %664 = vmatpush2.msra.mxu0 0.0
    %665 = vmatprep.mubr.f32.mxu0 0.0
    %666 = vmatmul.mubr.f32.gmra.mxu0 %v599
    %v667 = vpop.f32.mrf.mxu0
    %v668 = vadd.f32 0.0, %v667
    %v669 = vpop.f32.mrf.mxu0
    %670 = vdwg.mxu0
    %v672 = vrot.slane %v668, 4
    %v674 = vadd.f32 %v169, %v672
    %v675 = vxor.u32 %v674, 2147483648
    %v676 = vmul.f32 %v675, 1.442695
    %v677 = vpow.pop %v676
    %v678 = vadd.f32 %v677, 1.0
    %v679 = vrcp.pop %v678
    %v680 = vmul.f32 1.0, %v679
    %v681 = vtanh.pop %v674
    %v683 = vrot.slane %v481, 6
    %v685 = vmul.f32 %v680, %v683
    %687 = vrot.lane.b32.xlu0 %v681, 96
    %v688 = vpop.permute.xlu0 %687
    %v690 = vmul.f32 %v680, %v688
    %692 = vrot.lane.b32.xlu0 %v690, 16
    %v693 = vpop.permute.xlu0 %692
    %v695 = vadd.f32 %v685, %v693
    %v696 = vtanh.pop %v695
    %698 = vrot.lane.b32.xlu0 %v696, 32
    %v699 = vpop.permute.xlu0 %698
    %v701 = vmul.f32 %v680, %v699
    %703 = vrot.lane.b32.xlu0 %v701, 80
    %v704 = vpop.permute.xlu0 %703
    %v707 = vrot.slane %v595, 4
    %708 = vrot.lane.b32.xlu0 %v707, 96
    %v709 = vpop.permute.xlu0 %708
    %v711 = vsel %vm177, %v704, %v709
    %v713 = vrot.slane %v711, 4
    %v714 = vsel %vm287, %v713, 0
    %716 = vmatprep.subr.mxu0 0.0
    %717 = vmatpush1.msra.mxu0 0.0
    %718 = vmatprep.subr.mxu0 0.0
    %719 = vmatpush1.msra.mxu0 0.0
    %720 = vmatprep.subr.mxu0 0.0
    %721 = vmatpush1.msra.mxu0 0.0
    %722 = vmatprep.subr.mxu0 0.0
    %723 = vmatpush1.msra.mxu0 0.0
    %724 = vmatprep.subr.mxu0 0.0
    %725 = vmatpush1.msra.mxu0 0.0
    %726 = vmatprep.subr.mxu0 0.0
    %727 = vmatpush1.msra.mxu0 0.0
    %728 = vmatprep.subr.mxu0 0.0
    %729 = vmatpush1.msra.mxu0 0.0
    %730 = vmatprep.subr.mxu0 0.0
    %731 = vmatpush1.msra.mxu0 0.0
    %732 = vmatprep.subr.mxu0 0.0
    %733 = vmatpush1.msra.mxu0 0.0
    %734 = vmatprep.subr.mxu0 0.0
    %735 = vmatpush1.msra.mxu0 0.0
    %736 = vmatprep.subr.mxu0 0.0
    %737 = vmatpush1.msra.mxu0 0.0
    %738 = vmatprep.subr.mxu0 0.0
    %739 = vmatpush1.msra.mxu0 0.0
    %740 = vmatprep.subr.mxu0 0.0
    %741 = vmatpush1.msra.mxu0 %v85
    %742 = vmatprep.subr.mxu0 0.0
    %743 = vmatpush1.msra.mxu0 %v84
    %744 = vmatprep.subr.mxu0 0.0
    %745 = vmatpush1.msra.mxu0 %v83
    %746 = vmatprep.subr.mxu0 0.0
    %747 = vmatpush1.msra.mxu0 %v82
    %748 = vmatprep.subr.mxu0 0.0
    %749 = vmatpush2.msra.mxu0 0.0
    %750 = vmatprep.subr.mxu0 0.0
    %751 = vmatpush2.msra.mxu0 0.0
    %752 = vmatprep.subr.mxu0 0.0
    %753 = vmatpush2.msra.mxu0 0.0
    %754 = vmatprep.subr.mxu0 0.0
    %755 = vmatpush2.msra.mxu0 0.0
    %756 = vmatprep.subr.mxu0 0.0
    %757 = vmatpush2.msra.mxu0 0.0
    %758 = vmatprep.subr.mxu0 0.0
    %759 = vmatpush2.msra.mxu0 0.0
    %760 = vmatprep.subr.mxu0 0.0
    %761 = vmatpush2.msra.mxu0 0.0
    %762 = vmatprep.subr.mxu0 0.0
    %763 = vmatpush2.msra.mxu0 0.0
    %764 = vmatprep.subr.mxu0 0.0
    %765 = vmatpush2.msra.mxu0 0.0
    %766 = vmatprep.subr.mxu0 0.0
    %767 = vmatpush2.msra.mxu0 0.0
    %768 = vmatprep.subr.mxu0 0.0
    %769 = vmatpush2.msra.mxu0 0.0
    %770 = vmatprep.subr.mxu0 0.0
    %771 = vmatpush2.msra.mxu0 0.0
    %772 = vmatprep.subr.mxu0 0.0
    %773 = vmatpush2.msra.mxu0 0.0
    %774 = vmatprep.subr.mxu0 0.0
    %775 = vmatpush2.msra.mxu0 0.0
    %776 = vmatprep.subr.mxu0 0.0
    %777 = vmatpush2.msra.mxu0 0.0
    %778 = vmatprep.subr.mxu0 0.0
    %779 = vmatpush2.msra.mxu0 0.0
    %780 = vmatprep.mubr.f32.mxu0 0.0
    %781 = vmatmul.mubr.f32.gmra.mxu0 %v714
    %v782 = vpop.f32.mrf.mxu0
    %v783 = vadd.f32 %v285, %v782
    %v784 = vpop.f32.mrf.mxu0
    %785 = vdwg.mxu0
    %v786 = vxor.u32 %v783, 2147483648
    %v787 = vmul.f32 %v786, 1.442695
    %v788 = vpow.pop %v787
    %v789 = vadd.f32 %v788, 1.0
    %v790 = vrcp.pop %v789
    %v791 = vmul.f32 1.0, %v790
    %v792 = vtanh.pop %v783
    %v793 = vmul.f32 %v791, %v589
    %795 = vrot.lane.b32.xlu0 %v792, 96
    %v796 = vpop.permute.xlu0 %795
    %v798 = vmul.f32 %v791, %v796
    %800 = vrot.lane.b32.xlu0 %v798, 16
    %v801 = vpop.permute.xlu0 %800
    %v803 = vadd.f32 %v793, %v801
    %v804 = vtanh.pop %v803
    %806 = vrot.lane.b32.xlu0 %v804, 32
    %v807 = vpop.permute.xlu0 %806
    %v809 = vmul.f32 %v791, %v807
    %v810 = vrot.slane %v701, 4
    %811 = vrot.lane.b32.xlu0 %v810, 80
    %v812 = vpop.permute.xlu0 %811
    %v813 = vsel %vm177, %v812, 0
    %815 = vmatprep.subr.mxu0 0.0
    %816 = vmatpush1.msra.mxu0 0.0
    %817 = vmatprep.subr.mxu0 0.0
    %818 = vmatpush1.msra.mxu0 0.0
    %819 = vmatprep.subr.mxu0 0.0
    %820 = vmatpush1.msra.mxu0 0.0
    %821 = vmatprep.subr.mxu0 0.0
    %822 = vmatpush1.msra.mxu0 0.0
    %823 = vmatprep.subr.mxu0 0.0
    %824 = vmatpush1.msra.mxu0 0.0
    %825 = vmatprep.subr.mxu0 0.0
    %826 = vmatpush1.msra.mxu0 0.0
    %827 = vmatprep.subr.mxu0 0.0
    %828 = vmatpush1.msra.mxu0 0.0
    %829 = vmatprep.subr.mxu0 0.0
    %830 = vmatpush1.msra.mxu0 0.0
    %831 = vmatprep.subr.mxu0 0.0
    %832 = vmatpush1.msra.mxu0 0.0
    %833 = vmatprep.subr.mxu0 0.0
    %834 = vmatpush1.msra.mxu0 0.0
    %835 = vmatprep.subr.mxu0 0.0
    %836 = vmatpush1.msra.mxu0 0.0
    %837 = vmatprep.subr.mxu0 0.0
    %838 = vmatpush1.msra.mxu0 0.0
    %839 = vmatprep.subr.mxu0 0.0
    %840 = vmatpush1.msra.mxu0 0.0
    %841 = vmatprep.subr.mxu0 0.0
    %842 = vmatpush1.msra.mxu0 0.0
    %843 = vmatprep.subr.mxu0 0.0
    %844 = vmatpush1.msra.mxu0 %v80
    %845 = vmatprep.subr.mxu0 0.0
    %846 = vmatpush1.msra.mxu0 %v79
    %847 = vmatprep.subr.mxu0 0.0
    %848 = vmatpush2.msra.mxu0 0.0
    %849 = vmatprep.subr.mxu0 0.0
    %850 = vmatpush2.msra.mxu0 0.0
    %851 = vmatprep.subr.mxu0 0.0
    %852 = vmatpush2.msra.mxu0 0.0
    %853 = vmatprep.subr.mxu0 0.0
    %854 = vmatpush2.msra.mxu0 0.0
    %855 = vmatprep.subr.mxu0 0.0
    %856 = vmatpush2.msra.mxu0 0.0
    %857 = vmatprep.subr.mxu0 0.0
    %858 = vmatpush2.msra.mxu0 0.0
    %859 = vmatprep.subr.mxu0 0.0
    %860 = vmatpush2.msra.mxu0 0.0
    %861 = vmatprep.subr.mxu0 0.0
    %862 = vmatpush2.msra.mxu0 0.0
    %863 = vmatprep.subr.mxu0 0.0
    %864 = vmatpush2.msra.mxu0 0.0
    %865 = vmatprep.subr.mxu0 0.0
    %866 = vmatpush2.msra.mxu0 0.0
    %867 = vmatprep.subr.mxu0 0.0
    %868 = vmatpush2.msra.mxu0 0.0
    %869 = vmatprep.subr.mxu0 0.0
    %870 = vmatpush2.msra.mxu0 0.0
    %871 = vmatprep.subr.mxu0 0.0
    %872 = vmatpush2.msra.mxu0 0.0
    %873 = vmatprep.subr.mxu0 0.0
    %874 = vmatpush2.msra.mxu0 0.0
    %875 = vmatprep.subr.mxu0 0.0
    %876 = vmatpush2.msra.mxu0 0.0
    %877 = vmatprep.subr.mxu0 0.0
    %878 = vmatpush2.msra.mxu0 0.0
    %879 = vmatprep.mubr.f32.mxu0 0.0
    %880 = vmatmul.mubr.f32.gmra.mxu0 %v813
    %v881 = vpop.f32.mrf.mxu0
    %v882 = vadd.f32 0.0, %v881
    %v883 = vpop.f32.mrf.mxu0
    %884 = vdwg.mxu0
    %v886 = vrot.slane %v882, 2
    %v888 = vadd.f32 %v169, %v886
    %v889 = vxor.u32 %v888, 2147483648
    %v890 = vmul.f32 %v889, 1.442695
    %v891 = vpow.pop %v890
    %v892 = vadd.f32 %v891, 1.0
    %v893 = vrcp.pop %v892
    %v894 = vmul.f32 1.0, %v893
    %v895 = vtanh.pop %v888
    %v897 = vrot.slane %v695, 6
    %v899 = vmul.f32 %v894, %v897
    %901 = vrot.lane.b32.xlu0 %v895, 96
    %v902 = vpop.permute.xlu0 %901
    %v904 = vmul.f32 %v894, %v902
    %906 = vrot.lane.b32.xlu0 %v904, 16
    %v907 = vpop.permute.xlu0 %906
    %v909 = vadd.f32 %v899, %v907
    %v910 = vtanh.pop %v909
    %912 = vrot.lane.b32.xlu0 %v910, 32
    %v913 = vpop.permute.xlu0 %912
    %v915 = vmul.f32 %v894, %v913
    %917 = vrot.lane.b32.xlu0 %v915, 80
    %v918 = vpop.permute.xlu0 %917
    %v921 = vrot.slane %v809, 2
    %922 = vrot.lane.b32.xlu0 %v921, 96
    %v923 = vpop.permute.xlu0 %922
    %v925 = vsel %vm177, %v918, %v923
    %v927 = vrot.slane %v925, 6
    %v928 = vsel %vm287, %v927, 0
    %930 = vmatprep.subr.mxu0 0.0
    %931 = vmatpush1.msra.mxu0 0.0
    %932 = vmatprep.subr.mxu0 0.0
    %933 = vmatpush1.msra.mxu0 0.0
    %934 = vmatprep.subr.mxu0 0.0
    %935 = vmatpush1.msra.mxu0 0.0
    %936 = vmatprep.subr.mxu0 0.0
    %937 = vmatpush1.msra.mxu0 0.0
    %938 = vmatprep.subr.mxu0 0.0
    %939 = vmatpush1.msra.mxu0 0.0
    %940 = vmatprep.subr.mxu0 0.0
    %941 = vmatpush1.msra.mxu0 0.0
    %942 = vmatprep.subr.mxu0 0.0
    %943 = vmatpush1.msra.mxu0 0.0
    %944 = vmatprep.subr.mxu0 0.0
    %945 = vmatpush1.msra.mxu0 0.0
    %946 = vmatprep.subr.mxu0 0.0
    %947 = vmatpush1.msra.mxu0 0.0
    %948 = vmatprep.subr.mxu0 0.0
    %949 = vmatpush1.msra.mxu0 0.0
    %950 = vmatprep.subr.mxu0 0.0
    %951 = vmatpush1.msra.mxu0 0.0
    %952 = vmatprep.subr.mxu0 0.0
    %953 = vmatpush1.msra.mxu0 0.0
    %954 = vmatprep.subr.mxu0 0.0
    %955 = vmatpush1.msra.mxu0 %v85
    %956 = vmatprep.subr.mxu0 0.0
    %957 = vmatpush1.msra.mxu0 %v84
    %958 = vmatprep.subr.mxu0 0.0
    %959 = vmatpush1.msra.mxu0 %v83
    %960 = vmatprep.subr.mxu0 0.0
    %961 = vmatpush1.msra.mxu0 %v82
    %962 = vmatprep.subr.mxu0 0.0
    %963 = vmatpush2.msra.mxu0 0.0
    %964 = vmatprep.subr.mxu0 0.0
    %965 = vmatpush2.msra.mxu0 0.0
    %966 = vmatprep.subr.mxu0 0.0
    %967 = vmatpush2.msra.mxu0 0.0
    %968 = vmatprep.subr.mxu0 0.0
    %969 = vmatpush2.msra.mxu0 0.0
    %970 = vmatprep.subr.mxu0 0.0
    %971 = vmatpush2.msra.mxu0 0.0
    %972 = vmatprep.subr.mxu0 0.0
    %973 = vmatpush2.msra.mxu0 0.0
    %974 = vmatprep.subr.mxu0 0.0
    %975 = vmatpush2.msra.mxu0 0.0
    %976 = vmatprep.subr.mxu0 0.0
    %977 = vmatpush2.msra.mxu0 0.0
    %978 = vmatprep.subr.mxu0 0.0
    %979 = vmatpush2.msra.mxu0 0.0
    %980 = vmatprep.subr.mxu0 0.0
    %981 = vmatpush2.msra.mxu0 0.0
    %982 = vmatprep.subr.mxu0 0.0
    %983 = vmatpush2.msra.mxu0 0.0
    %984 = vmatprep.subr.mxu0 0.0
    %985 = vmatpush2.msra.mxu0 0.0
    %986 = vmatprep.subr.mxu0 0.0
    %987 = vmatpush2.msra.mxu0 0.0
    %988 = vmatprep.subr.mxu0 0.0
    %989 = vmatpush2.msra.mxu0 0.0
    %990 = vmatprep.subr.mxu0 0.0
    %991 = vmatpush2.msra.mxu0 0.0
    %992 = vmatprep.subr.mxu0 0.0
    %993 = vmatpush2.msra.mxu0 0.0
    %994 = vmatprep.mubr.f32.mxu0 0.0
    %995 = vmatmul.mubr.f32.gmra.mxu0 %v928
    %v996 = vpop.f32.mrf.mxu0
    %v997 = vadd.f32 %v285, %v996
    %v998 = vpop.f32.mrf.mxu0
    %999 = vdwg.mxu0
    %v1000 = vxor.u32 %v997, 2147483648
    %v1001 = vmul.f32 %v1000, 1.442695
    %v1002 = vpow.pop %v1001
    %v1003 = vadd.f32 %v1002, 1.0
    %v1004 = vrcp.pop %v1003
    %v1005 = vmul.f32 1.0, %v1004
    %v1006 = vtanh.pop %v997
    %v1007 = vmul.f32 %v1005, %v803
    %1009 = vrot.lane.b32.xlu0 %v1006, 96
    %v1010 = vpop.permute.xlu0 %1009
    %v1012 = vmul.f32 %v1005, %v1010
    %1014 = vrot.lane.b32.xlu0 %v1012, 16
    %v1015 = vpop.permute.xlu0 %1014
    %v1017 = vadd.f32 %v1007, %v1015
    %v1018 = vtanh.pop %v1017
    %1020 = vrot.lane.b32.xlu0 %v1018, 32
    %v1021 = vpop.permute.xlu0 %1020
    %v1023 = vmul.f32 %v1005, %v1021
    %v1024 = vrot.slane %v915, 6
    %1025 = vrot.lane.b32.xlu0 %v1024, 80
    %v1026 = vpop.permute.xlu0 %1025
    %v1027 = vsel %vm177, %v1026, 0
    %1029 = vmatprep.subr.mxu0 0.0
    %1030 = vmatpush1.msra.mxu0 0.0
    %1031 = vmatprep.subr.mxu0 0.0
    %1032 = vmatpush1.msra.mxu0 0.0
    %1033 = vmatprep.subr.mxu0 0.0
    %1034 = vmatpush1.msra.mxu0 0.0
    %1035 = vmatprep.subr.mxu0 0.0
    %1036 = vmatpush1.msra.mxu0 0.0
    %1037 = vmatprep.subr.mxu0 0.0
    %1038 = vmatpush1.msra.mxu0 0.0
    %1039 = vmatprep.subr.mxu0 0.0
    %1040 = vmatpush1.msra.mxu0 0.0
    %1041 = vmatprep.subr.mxu0 0.0
    %1042 = vmatpush1.msra.mxu0 0.0
    %1043 = vmatprep.subr.mxu0 0.0
    %1044 = vmatpush1.msra.mxu0 0.0
    %1045 = vmatprep.subr.mxu0 0.0
    %1046 = vmatpush1.msra.mxu0 0.0
    %1047 = vmatprep.subr.mxu0 0.0
    %1048 = vmatpush1.msra.mxu0 0.0
    %1049 = vmatprep.subr.mxu0 0.0
    %1050 = vmatpush1.msra.mxu0 0.0
    %1051 = vmatprep.subr.mxu0 0.0
    %1052 = vmatpush1.msra.mxu0 0.0
    %1053 = vmatprep.subr.mxu0 0.0
    %1054 = vmatpush1.msra.mxu0 0.0
    %1055 = vmatprep.subr.mxu0 0.0
    %1056 = vmatpush1.msra.mxu0 0.0
    %1057 = vmatprep.subr.mxu0 0.0
    %1058 = vmatpush1.msra.mxu0 %v80
    %1059 = vmatprep.subr.mxu0 0.0
    %1060 = vmatpush1.msra.mxu0 %v79
    %1061 = vmatprep.subr.mxu0 0.0
    %1062 = vmatpush2.msra.mxu0 0.0
    %1063 = vmatprep.subr.mxu0 0.0
    %1064 = vmatpush2.msra.mxu0 0.0
    %1065 = vmatprep.subr.mxu0 0.0
    %1066 = vmatpush2.msra.mxu0 0.0
    %1067 = vmatprep.subr.mxu0 0.0
    %1068 = vmatpush2.msra.mxu0 0.0
    %1069 = vmatprep.subr.mxu0 0.0
    %1070 = vmatpush2.msra.mxu0 0.0
    %1071 = vmatprep.subr.mxu0 0.0
    %1072 = vmatpush2.msra.mxu0 0.0
    %1073 = vmatprep.subr.mxu0 0.0
    %1074 = vmatpush2.msra.mxu0 0.0
    %1075 = vmatprep.subr.mxu0 0.0
    %1076 = vmatpush2.msra.mxu0 0.0
    %1077 = vmatprep.subr.mxu0 0.0
    %1078 = vmatpush2.msra.mxu0 0.0
    %1079 = vmatprep.subr.mxu0 0.0
    %1080 = vmatpush2.msra.mxu0 0.0
    %1081 = vmatprep.subr.mxu0 0.0
    %1082 = vmatpush2.msra.mxu0 0.0
    %1083 = vmatprep.subr.mxu0 0.0
    %1084 = vmatpush2.msra.mxu0 0.0
    %1085 = vmatprep.subr.mxu0 0.0
    %1086 = vmatpush2.msra.mxu0 0.0
    %1087 = vmatprep.subr.mxu0 0.0
    %1088 = vmatpush2.msra.mxu0 0.0
    %1089 = vmatprep.subr.mxu0 0.0
    %1090 = vmatpush2.msra.mxu0 0.0
    %1091 = vmatprep.subr.mxu0 0.0
    %1092 = vmatpush2.msra.mxu0 0.0
    %1093 = vmatprep.mubr.f32.mxu0 0.0
    %1094 = vmatmul.mubr.f32.gmra.mxu0 %v1027
    %v1095 = vpop.f32.mrf.mxu0
    %v1096 = vadd.f32 0.0, %v1095
    %v1097 = vpop.f32.mrf.mxu0
    %1098 = vdwg.mxu0
    %v1099 = vadd.f32 %v174, %v1096
    %v1100 = vxor.u32 %v1099, 2147483648
    %v1101 = vmul.f32 %v1100, 1.442695
    %v1102 = vpow.pop %v1101
    %v1103 = vadd.f32 %v1102, 1.0
    %v1104 = vrcp.pop %v1103
    %v1105 = vmul.f32 1.0, %v1104
    %v1106 = vtanh.pop %v1099
    %v1108 = vrot.slane %v909, 6
    %v1110 = vmul.f32 %v1105, %v1108
    %1112 = vrot.lane.b32.xlu0 %v1106, 96
    %v1113 = vpop.permute.xlu0 %1112
    %v1115 = vmul.f32 %v1105, %v1113
    %1117 = vrot.lane.b32.xlu0 %v1115, 16
    %v1118 = vpop.permute.xlu0 %1117
    %v1120 = vadd.f32 %v1110, %v1118
    %v1121 = vtanh.pop %v1120
    %1123 = vrot.lane.b32.xlu0 %v1121, 32
    %v1124 = vpop.permute.xlu0 %1123
    %v1126 = vmul.f32 %v1105, %v1124
    %1128 = vrot.lane.b32.xlu0 %v1126, 80
    %v1129 = vpop.permute.xlu0 %1128
    %1132 = vrot.lane.b32.xlu0 %v1023, 96
    %v1133 = vpop.permute.xlu0 %1132
    %v1135 = vsel %vm177, %v1129, %v1133
    %v1137 = vsel %vm287, %v1135, 0
    %1139 = vmatprep.subr.mxu0 0.0
    %1140 = vmatpush1.msra.mxu0 0.0
    %1141 = vmatprep.subr.mxu0 0.0
    %1142 = vmatpush1.msra.mxu0 0.0
    %1143 = vmatprep.subr.mxu0 0.0
    %1144 = vmatpush1.msra.mxu0 0.0
    %1145 = vmatprep.subr.mxu0 0.0
    %1146 = vmatpush1.msra.mxu0 0.0
    %1147 = vmatprep.subr.mxu0 0.0
    %1148 = vmatpush1.msra.mxu0 0.0
    %1149 = vmatprep.subr.mxu0 0.0
    %1150 = vmatpush1.msra.mxu0 0.0
    %1151 = vmatprep.subr.mxu0 0.0
    %1152 = vmatpush1.msra.mxu0 0.0
    %1153 = vmatprep.subr.mxu0 0.0
    %1154 = vmatpush1.msra.mxu0 0.0
    %1155 = vmatprep.subr.mxu0 0.0
    %1156 = vmatpush1.msra.mxu0 0.0
    %1157 = vmatprep.subr.mxu0 0.0
    %1158 = vmatpush1.msra.mxu0 0.0
    %1159 = vmatprep.subr.mxu0 0.0
    %1160 = vmatpush1.msra.mxu0 0.0
    %1161 = vmatprep.subr.mxu0 0.0
    %1162 = vmatpush1.msra.mxu0 0.0
    %1163 = vmatprep.subr.mxu0 0.0
    %1164 = vmatpush1.msra.mxu0 %v85
    %1165 = vmatprep.subr.mxu0 0.0
    %1166 = vmatpush1.msra.mxu0 %v84
    %1167 = vmatprep.subr.mxu0 0.0
    %1168 = vmatpush1.msra.mxu0 %v83
    %1169 = vmatprep.subr.mxu0 0.0
    %1170 = vmatpush1.msra.mxu0 %v82
    %1171 = vmatprep.subr.mxu0 0.0
    %1172 = vmatpush2.msra.mxu0 0.0
    %1173 = vmatprep.subr.mxu0 0.0
    %1174 = vmatpush2.msra.mxu0 0.0
    %1175 = vmatprep.subr.mxu0 0.0
    %1176 = vmatpush2.msra.mxu0 0.0
    %1177 = vmatprep.subr.mxu0 0.0
    %1178 = vmatpush2.msra.mxu0 0.0
    %1179 = vmatprep.subr.mxu0 0.0
    %1180 = vmatpush2.msra.mxu0 0.0
    %1181 = vmatprep.subr.mxu0 0.0
    %1182 = vmatpush2.msra.mxu0 0.0
    %1183 = vmatprep.subr.mxu0 0.0
    %1184 = vmatpush2.msra.mxu0 0.0
    %1185 = vmatprep.subr.mxu0 0.0
    %1186 = vmatpush2.msra.mxu0 0.0
    %1187 = vmatprep.subr.mxu0 0.0
    %1188 = vmatpush2.msra.mxu0 0.0
    %1189 = vmatprep.subr.mxu0 0.0
    %1190 = vmatpush2.msra.mxu0 0.0
    %1191 = vmatprep.subr.mxu0 0.0
    %1192 = vmatpush2.msra.mxu0 0.0
    %1193 = vmatprep.subr.mxu0 0.0
    %1194 = vmatpush2.msra.mxu0 0.0
    %1195 = vmatprep.subr.mxu0 0.0
    %1196 = vmatpush2.msra.mxu0 0.0
    %1197 = vmatprep.subr.mxu0 0.0
    %1198 = vmatpush2.msra.mxu0 0.0
    %1199 = vmatprep.subr.mxu0 0.0
    %1200 = vmatpush2.msra.mxu0 0.0
    %1201 = vmatprep.subr.mxu0 0.0
    %1202 = vmatpush2.msra.mxu0 0.0
    %1203 = vmatprep.mubr.f32.mxu0 0.0
    %1204 = vmatmul.mubr.f32.gmra.mxu0 %v1137
    %v1205 = vpop.f32.mrf.mxu0
    %v1206 = vadd.f32 %v285, %v1205
    %v1207 = vpop.f32.mrf.mxu0
    %1208 = vdwg.mxu0
    %v1209 = vxor.u32 %v1206, 2147483648
    %v1210 = vmul.f32 %v1209, 1.442695
    %v1211 = vpow.pop %v1210
    %v1212 = vadd.f32 %v1211, 1.0
    %v1213 = vrcp.pop %v1212
    %v1214 = vmul.f32 1.0, %v1213
    %v1215 = vtanh.pop %v1206
    %v1216 = vmul.f32 %v1214, %v1017
    %1218 = vrot.lane.b32.xlu0 %v1215, 96
    %v1219 = vpop.permute.xlu0 %1218
    %v1221 = vmul.f32 %v1214, %v1219
    %1223 = vrot.lane.b32.xlu0 %v1221, 16
    %v1224 = vpop.permute.xlu0 %1223
    %v1226 = vadd.f32 %v1216, %v1224
    %v1227 = vtanh.pop %v1226
    %1229 = vrot.lane.b32.xlu0 %v1227, 32
    %v1230 = vpop.permute.xlu0 %1229
    %v1232 = vmul.f32 %v1214, %v1230
    %v1233 = vsel %vm177, %v1129, 0
    %1235 = vmatprep.subr.mxu0 0.0
    %1236 = vmatpush1.msra.mxu0 0.0
    %1237 = vmatprep.subr.mxu0 0.0
    %1238 = vmatpush1.msra.mxu0 0.0
    %1239 = vmatprep.subr.mxu0 0.0
    %1240 = vmatpush1.msra.mxu0 0.0
    %1241 = vmatprep.subr.mxu0 0.0
    %1242 = vmatpush1.msra.mxu0 0.0
    %1243 = vmatprep.subr.mxu0 0.0
    %1244 = vmatpush1.msra.mxu0 0.0
    %1245 = vmatprep.subr.mxu0 0.0
    %1246 = vmatpush1.msra.mxu0 0.0
    %1247 = vmatprep.subr.mxu0 0.0
    %1248 = vmatpush1.msra.mxu0 0.0
    %1249 = vmatprep.subr.mxu0 0.0
    %1250 = vmatpush1.msra.mxu0 0.0
    %1251 = vmatprep.subr.mxu0 0.0
    %1252 = vmatpush1.msra.mxu0 0.0
    %1253 = vmatprep.subr.mxu0 0.0
    %1254 = vmatpush1.msra.mxu0 0.0
    %1255 = vmatprep.subr.mxu0 0.0
    %1256 = vmatpush1.msra.mxu0 0.0
    %1257 = vmatprep.subr.mxu0 0.0
    %1258 = vmatpush1.msra.mxu0 0.0
    %1259 = vmatprep.subr.mxu0 0.0
    %1260 = vmatpush1.msra.mxu0 0.0
    %1261 = vmatprep.subr.mxu0 0.0
    %1262 = vmatpush1.msra.mxu0 0.0
    %1263 = vmatprep.subr.mxu0 0.0
    %1264 = vmatpush1.msra.mxu0 %v80
    %1265 = vmatprep.subr.mxu0 0.0
    %1266 = vmatpush1.msra.mxu0 %v79
    %1267 = vmatprep.subr.mxu0 0.0
    %1268 = vmatpush2.msra.mxu0 0.0
    %1269 = vmatprep.subr.mxu0 0.0
    %1270 = vmatpush2.msra.mxu0 0.0
    %1271 = vmatprep.subr.mxu0 0.0
    %1272 = vmatpush2.msra.mxu0 0.0
    %1273 = vmatprep.subr.mxu0 0.0
    %1274 = vmatpush2.msra.mxu0 0.0
    %1275 = vmatprep.subr.mxu0 0.0
    %1276 = vmatpush2.msra.mxu0 0.0
    %1277 = vmatprep.subr.mxu0 0.0
    %1278 = vmatpush2.msra.mxu0 0.0
    %1279 = vmatprep.subr.mxu0 0.0
    %1280 = vmatpush2.msra.mxu0 0.0
    %1281 = vmatprep.subr.mxu0 0.0
    %1282 = vmatpush2.msra.mxu0 0.0
    %1283 = vmatprep.subr.mxu0 0.0
    %1284 = vmatpush2.msra.mxu0 0.0
    %1285 = vmatprep.subr.mxu0 0.0
    %1286 = vmatpush2.msra.mxu0 0.0
    %1287 = vmatprep.subr.mxu0 0.0
    %1288 = vmatpush2.msra.mxu0 0.0
    %1289 = vmatprep.subr.mxu0 0.0
    %1290 = vmatpush2.msra.mxu0 0.0
    %1291 = vmatprep.subr.mxu0 0.0
    %1292 = vmatpush2.msra.mxu0 0.0
    %1293 = vmatprep.subr.mxu0 0.0
    %1294 = vmatpush2.msra.mxu0 0.0
    %1295 = vmatprep.subr.mxu0 0.0
    %1296 = vmatpush2.msra.mxu0 0.0
    %1297 = vmatprep.subr.mxu0 0.0
    %1298 = vmatpush2.msra.mxu0 0.0
    %1299 = vmatprep.mubr.f32.mxu0 0.0
    %1300 = vmatmul.mubr.f32.gmra.mxu0 %v1233
    %v1301 = vpop.f32.mrf.mxu0
    %v1302 = vadd.f32 0.0, %v1301
    %v1303 = vpop.f32.mrf.mxu0
    %1304 = vdwg.mxu0
    %v1306 = vrot.slane %v1302, 6
    %v1308 = vadd.f32 %v174, %v1306
    %v1309 = vxor.u32 %v1308, 2147483648
    %v1310 = vmul.f32 %v1309, 1.442695
    %v1311 = vpow.pop %v1310
    %v1312 = vadd.f32 %v1311, 1.0
    %v1313 = vrcp.pop %v1312
    %v1314 = vmul.f32 1.0, %v1313
    %v1315 = vtanh.pop %v1308
    %v1317 = vrot.slane %v1120, 6
    %v1319 = vmul.f32 %v1314, %v1317
    %1321 = vrot.lane.b32.xlu0 %v1315, 96
    %v1322 = vpop.permute.xlu0 %1321
    %v1324 = vmul.f32 %v1314, %v1322
    %1326 = vrot.lane.b32.xlu0 %v1324, 16
    %v1327 = vpop.permute.xlu0 %1326
    %v1329 = vadd.f32 %v1319, %v1327
    %v1330 = vtanh.pop %v1329
    %1332 = vrot.lane.b32.xlu0 %v1330, 32
    %v1333 = vpop.permute.xlu0 %1332
    %v1335 = vmul.f32 %v1314, %v1333
    %1337 = vrot.lane.b32.xlu0 %v1335, 80
    %v1338 = vpop.permute.xlu0 %1337
    %v1341 = vrot.slane %v1232, 6
    %1342 = vrot.lane.b32.xlu0 %v1341, 96
    %v1343 = vpop.permute.xlu0 %1342
    %v1345 = vsel %vm177, %v1338, %v1343
    %v1347 = vrot.slane %v1345, 2
    %v1348 = vsel %vm287, %v1347, 0
    %1350 = vmatprep.subr.mxu0 0.0
    %1351 = vmatpush1.msra.mxu0 0.0
    %1352 = vmatprep.subr.mxu0 0.0
    %1353 = vmatpush1.msra.mxu0 0.0
    %1354 = vmatprep.subr.mxu0 0.0
    %1355 = vmatpush1.msra.mxu0 0.0
    %1356 = vmatprep.subr.mxu0 0.0
    %1357 = vmatpush1.msra.mxu0 0.0
    %1358 = vmatprep.subr.mxu0 0.0
    %1359 = vmatpush1.msra.mxu0 0.0
    %1360 = vmatprep.subr.mxu0 0.0
    %1361 = vmatpush1.msra.mxu0 0.0
    %1362 = vmatprep.subr.mxu0 0.0
    %1363 = vmatpush1.msra.mxu0 0.0
    %1364 = vmatprep.subr.mxu0 0.0
    %1365 = vmatpush1.msra.mxu0 0.0
    %1366 = vmatprep.subr.mxu0 0.0
    %1367 = vmatpush1.msra.mxu0 0.0
    %1368 = vmatprep.subr.mxu0 0.0
    %1369 = vmatpush1.msra.mxu0 0.0
    %1370 = vmatprep.subr.mxu0 0.0
    %1371 = vmatpush1.msra.mxu0 0.0
    %1372 = vmatprep.subr.mxu0 0.0
    %1373 = vmatpush1.msra.mxu0 0.0
    %1374 = vmatprep.subr.mxu0 0.0
    %1375 = vmatpush1.msra.mxu0 %v85
    %1376 = vmatprep.subr.mxu0 0.0
    %1377 = vmatpush1.msra.mxu0 %v84
    %1378 = vmatprep.subr.mxu0 0.0
    %1379 = vmatpush1.msra.mxu0 %v83
    %1380 = vmatprep.subr.mxu0 0.0
    %1381 = vmatpush1.msra.mxu0 %v82
    %1382 = vmatprep.subr.mxu0 0.0
    %1383 = vmatpush2.msra.mxu0 0.0
    %1384 = vmatprep.subr.mxu0 0.0
    %1385 = vmatpush2.msra.mxu0 0.0
    %1386 = vmatprep.subr.mxu0 0.0
    %1387 = vmatpush2.msra.mxu0 0.0
    %1388 = vmatprep.subr.mxu0 0.0
    %1389 = vmatpush2.msra.mxu0 0.0
    %1390 = vmatprep.subr.mxu0 0.0
    %1391 = vmatpush2.msra.mxu0 0.0
    %1392 = vmatprep.subr.mxu0 0.0
    %1393 = vmatpush2.msra.mxu0 0.0
    %1394 = vmatprep.subr.mxu0 0.0
    %1395 = vmatpush2.msra.mxu0 0.0
    %1396 = vmatprep.subr.mxu0 0.0
    %1397 = vmatpush2.msra.mxu0 0.0
    %1398 = vmatprep.subr.mxu0 0.0
    %1399 = vmatpush2.msra.mxu0 0.0
    %1400 = vmatprep.subr.mxu0 0.0
    %1401 = vmatpush2.msra.mxu0 0.0
    %1402 = vmatprep.subr.mxu0 0.0
    %1403 = vmatpush2.msra.mxu0 0.0
    %1404 = vmatprep.subr.mxu0 0.0
    %1405 = vmatpush2.msra.mxu0 0.0
    %1406 = vmatprep.subr.mxu0 0.0
    %1407 = vmatpush2.msra.mxu0 0.0
    %1408 = vmatprep.subr.mxu0 0.0
    %1409 = vmatpush2.msra.mxu0 0.0
    %1410 = vmatprep.subr.mxu0 0.0
    %1411 = vmatpush2.msra.mxu0 0.0
    %1412 = vmatprep.subr.mxu0 0.0
    %1413 = vmatpush2.msra.mxu0 0.0
    %1414 = vmatprep.mubr.f32.mxu0 0.0
    %1415 = vmatmul.mubr.f32.gmra.mxu0 %v1348
    %v1416 = vpop.f32.mrf.mxu0
    %v1417 = vadd.f32 %v285, %v1416
    %v1418 = vpop.f32.mrf.mxu0
    %1419 = vdwg.mxu0
    %v1420 = vxor.u32 %v1417, 2147483648
    %v1421 = vmul.f32 %v1420, 1.442695
    %v1422 = vpow.pop %v1421
    %v1423 = vadd.f32 %v1422, 1.0
    %v1424 = vrcp.pop %v1423
    %v1425 = vmul.f32 1.0, %v1424
    %v1426 = vtanh.pop %v1417
    %v1427 = vmul.f32 %v1425, %v1226
    %1429 = vrot.lane.b32.xlu0 %v1426, 96
    %v1430 = vpop.permute.xlu0 %1429
    %v1432 = vmul.f32 %v1425, %v1430
    %1434 = vrot.lane.b32.xlu0 %v1432, 16
    %v1435 = vpop.permute.xlu0 %1434
    %v1437 = vadd.f32 %v1427, %v1435
    %v1438 = vtanh.pop %v1437
    %1440 = vrot.lane.b32.xlu0 %v1438, 32
    %v1441 = vpop.permute.xlu0 %1440
    %v1443 = vmul.f32 %v1425, %v1441
    %v1444 = vrot.slane %v1335, 2
    %1445 = vrot.lane.b32.xlu0 %v1444, 80
    %v1446 = vpop.permute.xlu0 %1445
    %v1447 = vsel %vm177, %v1446, 0
    %1449 = vmatprep.subr.mxu0 0.0
    %1450 = vmatpush1.msra.mxu0 0.0
    %1451 = vmatprep.subr.mxu0 0.0
    %1452 = vmatpush1.msra.mxu0 0.0
    %1453 = vmatprep.subr.mxu0 0.0
    %1454 = vmatpush1.msra.mxu0 0.0
    %1455 = vmatprep.subr.mxu0 0.0
    %1456 = vmatpush1.msra.mxu0 0.0
    %1457 = vmatprep.subr.mxu0 0.0
    %1458 = vmatpush1.msra.mxu0 0.0
    %1459 = vmatprep.subr.mxu0 0.0
    %1460 = vmatpush1.msra.mxu0 0.0
    %1461 = vmatprep.subr.mxu0 0.0
    %1462 = vmatpush1.msra.mxu0 0.0
    %1463 = vmatprep.subr.mxu0 0.0
    %1464 = vmatpush1.msra.mxu0 0.0
    %1465 = vmatprep.subr.mxu0 0.0
    %1466 = vmatpush1.msra.mxu0 0.0
    %1467 = vmatprep.subr.mxu0 0.0
    %1468 = vmatpush1.msra.mxu0 0.0
    %1469 = vmatprep.subr.mxu0 0.0
    %1470 = vmatpush1.msra.mxu0 0.0
    %1471 = vmatprep.subr.mxu0 0.0
    %1472 = vmatpush1.msra.mxu0 0.0
    %1473 = vmatprep.subr.mxu0 0.0
    %1474 = vmatpush1.msra.mxu0 0.0
    %1475 = vmatprep.subr.mxu0 0.0
    %1476 = vmatpush1.msra.mxu0 0.0
    %1477 = vmatprep.subr.mxu0 0.0
    %1478 = vmatpush1.msra.mxu0 %v80
    %1479 = vmatprep.subr.mxu0 0.0
    %1480 = vmatpush1.msra.mxu0 %v79
    %1481 = vmatprep.subr.mxu0 0.0
    %1482 = vmatpush2.msra.mxu0 0.0
    %1483 = vmatprep.subr.mxu0 0.0
    %1484 = vmatpush2.msra.mxu0 0.0
    %1485 = vmatprep.subr.mxu0 0.0
    %1486 = vmatpush2.msra.mxu0 0.0
    %1487 = vmatprep.subr.mxu0 0.0
    %1488 = vmatpush2.msra.mxu0 0.0
    %1489 = vmatprep.subr.mxu0 0.0
    %1490 = vmatpush2.msra.mxu0 0.0
    %1491 = vmatprep.subr.mxu0 0.0
    %1492 = vmatpush2.msra.mxu0 0.0
    %1493 = vmatprep.subr.mxu0 0.0
    %1494 = vmatpush2.msra.mxu0 0.0
    %1495 = vmatprep.subr.mxu0 0.0
    %1496 = vmatpush2.msra.mxu0 0.0
    %1497 = vmatprep.subr.mxu0 0.0
    %1498 = vmatpush2.msra.mxu0 0.0
    %1499 = vmatprep.subr.mxu0 0.0
    %1500 = vmatpush2.msra.mxu0 0.0
    %1501 = vmatprep.subr.mxu0 0.0
    %1502 = vmatpush2.msra.mxu0 0.0
    %1503 = vmatprep.subr.mxu0 0.0
    %1504 = vmatpush2.msra.mxu0 0.0
    %1505 = vmatprep.subr.mxu0 0.0
    %1506 = vmatpush2.msra.mxu0 0.0
    %1507 = vmatprep.subr.mxu0 0.0
    %1508 = vmatpush2.msra.mxu0 0.0
    %1509 = vmatprep.subr.mxu0 0.0
    %1510 = vmatpush2.msra.mxu0 0.0
    %1511 = vmatprep.subr.mxu0 0.0
    %1512 = vmatpush2.msra.mxu0 0.0
    %1513 = vmatprep.mubr.f32.mxu0 0.0
    %1514 = vmatmul.mubr.f32.gmra.mxu0 %v1447
    %v1515 = vpop.f32.mrf.mxu0
    %v1516 = vadd.f32 0.0, %v1515
    %v1517 = vpop.f32.mrf.mxu0
    %1518 = vdwg.mxu0
    %v1520 = vrot.slane %v1516, 4
    %v1522 = vadd.f32 %v174, %v1520
    %v1523 = vxor.u32 %v1522, 2147483648
    %v1524 = vmul.f32 %v1523, 1.442695
    %v1525 = vpow.pop %v1524
    %v1526 = vadd.f32 %v1525, 1.0
    %v1527 = vrcp.pop %v1526
    %v1528 = vmul.f32 1.0, %v1527
    %v1529 = vtanh.pop %v1522
    %v1531 = vrot.slane %v1329, 6
    %v1533 = vmul.f32 %v1528, %v1531
    %1535 = vrot.lane.b32.xlu0 %v1529, 96
    %v1536 = vpop.permute.xlu0 %1535
    %v1538 = vmul.f32 %v1528, %v1536
    %1540 = vrot.lane.b32.xlu0 %v1538, 16
    %v1541 = vpop.permute.xlu0 %1540
    %v1543 = vadd.f32 %v1533, %v1541
    %v1544 = vtanh.pop %v1543
    %1546 = vrot.lane.b32.xlu0 %v1544, 32
    %v1547 = vpop.permute.xlu0 %1546
    %v1549 = vmul.f32 %v1528, %v1547
    %1551 = vrot.lane.b32.xlu0 %v1549, 80
    %v1552 = vpop.permute.xlu0 %1551
    %v1555 = vrot.slane %v1443, 4
    %1556 = vrot.lane.b32.xlu0 %v1555, 96
    %v1557 = vpop.permute.xlu0 %1556
    %v1559 = vsel %vm177, %v1552, %v1557
    %v1561 = vrot.slane %v1559, 4
    %v1562 = vsel %vm287, %v1561, 0
    %1564 = vmatprep.subr.mxu0 0.0
    %1565 = vmatpush1.msra.mxu0 0.0
    %1566 = vmatprep.subr.mxu0 0.0
    %1567 = vmatpush1.msra.mxu0 0.0
    %1568 = vmatprep.subr.mxu0 0.0
    %1569 = vmatpush1.msra.mxu0 0.0
    %1570 = vmatprep.subr.mxu0 0.0
    %1571 = vmatpush1.msra.mxu0 0.0
    %1572 = vmatprep.subr.mxu0 0.0
    %1573 = vmatpush1.msra.mxu0 0.0
    %1574 = vmatprep.subr.mxu0 0.0
    %1575 = vmatpush1.msra.mxu0 0.0
    %1576 = vmatprep.subr.mxu0 0.0
    %1577 = vmatpush1.msra.mxu0 0.0
    %1578 = vmatprep.subr.mxu0 0.0
    %1579 = vmatpush1.msra.mxu0 0.0
    %1580 = vmatprep.subr.mxu0 0.0
    %1581 = vmatpush1.msra.mxu0 0.0
    %1582 = vmatprep.subr.mxu0 0.0
    %1583 = vmatpush1.msra.mxu0 0.0
    %1584 = vmatprep.subr.mxu0 0.0
    %1585 = vmatpush1.msra.mxu0 0.0
    %1586 = vmatprep.subr.mxu0 0.0
    %1587 = vmatpush1.msra.mxu0 0.0
    %1588 = vmatprep.subr.mxu0 0.0
    %1589 = vmatpush1.msra.mxu0 %v85
    %1590 = vmatprep.subr.mxu0 0.0
    %1591 = vmatpush1.msra.mxu0 %v84
    %1592 = vmatprep.subr.mxu0 0.0
    %1593 = vmatpush1.msra.mxu0 %v83
    %1594 = vmatprep.subr.mxu0 0.0
    %1595 = vmatpush1.msra.mxu0 %v82
    %1596 = vmatprep.subr.mxu0 0.0
    %1597 = vmatpush2.msra.mxu0 0.0
    %1598 = vmatprep.subr.mxu0 0.0
    %1599 = vmatpush2.msra.mxu0 0.0
    %1600 = vmatprep.subr.mxu0 0.0
    %1601 = vmatpush2.msra.mxu0 0.0
    %1602 = vmatprep.subr.mxu0 0.0
    %1603 = vmatpush2.msra.mxu0 0.0
    %1604 = vmatprep.subr.mxu0 0.0
    %1605 = vmatpush2.msra.mxu0 0.0
    %1606 = vmatprep.subr.mxu0 0.0
    %1607 = vmatpush2.msra.mxu0 0.0
    %1608 = vmatprep.subr.mxu0 0.0
    %1609 = vmatpush2.msra.mxu0 0.0
    %1610 = vmatprep.subr.mxu0 0.0
    %1611 = vmatpush2.msra.mxu0 0.0
    %1612 = vmatprep.subr.mxu0 0.0
    %1613 = vmatpush2.msra.mxu0 0.0
    %1614 = vmatprep.subr.mxu0 0.0
    %1615 = vmatpush2.msra.mxu0 0.0
    %1616 = vmatprep.subr.mxu0 0.0
    %1617 = vmatpush2.msra.mxu0 0.0
    %1618 = vmatprep.subr.mxu0 0.0
    %1619 = vmatpush2.msra.mxu0 0.0
    %1620 = vmatprep.subr.mxu0 0.0
    %1621 = vmatpush2.msra.mxu0 0.0
    %1622 = vmatprep.subr.mxu0 0.0
    %1623 = vmatpush2.msra.mxu0 0.0
    %1624 = vmatprep.subr.mxu0 0.0
    %1625 = vmatpush2.msra.mxu0 0.0
    %1626 = vmatprep.subr.mxu0 0.0
    %1627 = vmatpush2.msra.mxu0 0.0
    %1628 = vmatprep.mubr.f32.mxu0 0.0
    %1629 = vmatmul.mubr.f32.gmra.mxu0 %v1562
    %v1630 = vpop.f32.mrf.mxu0
    %v1631 = vadd.f32 %v285, %v1630
    %v1632 = vpop.f32.mrf.mxu0
    %1633 = vdwg.mxu0
    %v1634 = vxor.u32 %v1631, 2147483648
    %v1635 = vmul.f32 %v1634, 1.442695
    %v1636 = vpow.pop %v1635
    %v1637 = vadd.f32 %v1636, 1.0
    %v1638 = vrcp.pop %v1637
    %v1639 = vmul.f32 1.0, %v1638
    %v1640 = vtanh.pop %v1631
    %v1641 = vmul.f32 %v1639, %v1437
    %1643 = vrot.lane.b32.xlu0 %v1640, 96
    %v1644 = vpop.permute.xlu0 %1643
    %v1646 = vmul.f32 %v1639, %v1644
    %1648 = vrot.lane.b32.xlu0 %v1646, 16
    %v1649 = vpop.permute.xlu0 %1648
    %v1651 = vadd.f32 %v1641, %v1649
    %v1652 = vtanh.pop %v1651
    %1654 = vrot.lane.b32.xlu0 %v1652, 32
    %v1655 = vpop.permute.xlu0 %1654
    %v1657 = vmul.f32 %v1639, %v1655
    %v1658 = vrot.slane %v1549, 4
    %1659 = vrot.lane.b32.xlu0 %v1658, 80
    %v1660 = vpop.permute.xlu0 %1659
    %v1661 = vsel %vm177, %v1660, 0
    %1663 = vmatprep.subr.mxu0 0.0
    %1664 = vmatpush1.msra.mxu0 0.0
    %1665 = vmatprep.subr.mxu0 0.0
    %1666 = vmatpush1.msra.mxu0 0.0
    %1667 = vmatprep.subr.mxu0 0.0
    %1668 = vmatpush1.msra.mxu0 0.0
    %1669 = vmatprep.subr.mxu0 0.0
    %1670 = vmatpush1.msra.mxu0 0.0
    %1671 = vmatprep.subr.mxu0 0.0
    %1672 = vmatpush1.msra.mxu0 0.0
    %1673 = vmatprep.subr.mxu0 0.0
    %1674 = vmatpush1.msra.mxu0 0.0
    %1675 = vmatprep.subr.mxu0 0.0
    %1676 = vmatpush1.msra.mxu0 0.0
    %1677 = vmatprep.subr.mxu0 0.0
    %1678 = vmatpush1.msra.mxu0 0.0
    %1679 = vmatprep.subr.mxu0 0.0
    %1680 = vmatpush1.msra.mxu0 0.0
    %1681 = vmatprep.subr.mxu0 0.0
    %1682 = vmatpush1.msra.mxu0 0.0
    %1683 = vmatprep.subr.mxu0 0.0
    %1684 = vmatpush1.msra.mxu0 0.0
    %1685 = vmatprep.subr.mxu0 0.0
    %1686 = vmatpush1.msra.mxu0 0.0
    %1687 = vmatprep.subr.mxu0 0.0
    %1688 = vmatpush1.msra.mxu0 0.0
    %1689 = vmatprep.subr.mxu0 0.0
    %1690 = vmatpush1.msra.mxu0 0.0
    %1691 = vmatprep.subr.mxu0 0.0
    %1692 = vmatpush1.msra.mxu0 %v80
    %1693 = vmatprep.subr.mxu0 0.0
    %1694 = vmatpush1.msra.mxu0 %v79
    %1695 = vmatprep.subr.mxu0 0.0
    %1696 = vmatpush2.msra.mxu0 0.0
    %1697 = vmatprep.subr.mxu0 0.0
    %1698 = vmatpush2.msra.mxu0 0.0
    %1699 = vmatprep.subr.mxu0 0.0
    %1700 = vmatpush2.msra.mxu0 0.0
    %1701 = vmatprep.subr.mxu0 0.0
    %1702 = vmatpush2.msra.mxu0 0.0
    %1703 = vmatprep.subr.mxu0 0.0
    %1704 = vmatpush2.msra.mxu0 0.0
    %1705 = vmatprep.subr.mxu0 0.0
    %1706 = vmatpush2.msra.mxu0 0.0
    %1707 = vmatprep.subr.mxu0 0.0
    %1708 = vmatpush2.msra.mxu0 0.0
    %1709 = vmatprep.subr.mxu0 0.0
    %1710 = vmatpush2.msra.mxu0 0.0
    %1711 = vmatprep.subr.mxu0 0.0
    %1712 = vmatpush2.msra.mxu0 0.0
    %1713 = vmatprep.subr.mxu0 0.0
    %1714 = vmatpush2.msra.mxu0 0.0
    %1715 = vmatprep.subr.mxu0 0.0
    %1716 = vmatpush2.msra.mxu0 0.0
    %1717 = vmatprep.subr.mxu0 0.0
    %1718 = vmatpush2.msra.mxu0 0.0
    %1719 = vmatprep.subr.mxu0 0.0
    %1720 = vmatpush2.msra.mxu0 0.0
    %1721 = vmatprep.subr.mxu0 0.0
    %1722 = vmatpush2.msra.mxu0 0.0
    %1723 = vmatprep.subr.mxu0 0.0
    %1724 = vmatpush2.msra.mxu0 0.0
    %1725 = vmatprep.subr.mxu0 0.0
    %1726 = vmatpush2.msra.mxu0 0.0
    %1727 = vmatprep.mubr.f32.mxu0 0.0
    %1728 = vmatmul.mubr.f32.gmra.mxu0 %v1661
    %v1729 = vpop.f32.mrf.mxu0
    %v1730 = vadd.f32 0.0, %v1729
    %v1731 = vpop.f32.mrf.mxu0
    %1732 = vdwg.mxu0
    %v1734 = vrot.slane %v1730, 2
    %v1736 = vadd.f32 %v174, %v1734
    %v1737 = vxor.u32 %v1736, 2147483648
    %v1738 = vmul.f32 %v1737, 1.442695
    %v1739 = vpow.pop %v1738
    %v1740 = vadd.f32 %v1739, 1.0
    %v1741 = vrcp.pop %v1740
    %v1742 = vmul.f32 1.0, %v1741
    %v1743 = vtanh.pop %v1736
    %v1745 = vrot.slane %v1543, 6
    %v1747 = vmul.f32 %v1742, %v1745
    %1749 = vrot.lane.b32.xlu0 %v1743, 96
    %v1750 = vpop.permute.xlu0 %1749
    %v1752 = vmul.f32 %v1742, %v1750
    %1754 = vrot.lane.b32.xlu0 %v1752, 16
    %v1755 = vpop.permute.xlu0 %1754
    %v1757 = vadd.f32 %v1747, %v1755
    %v1758 = vtanh.pop %v1757
    %1760 = vrot.lane.b32.xlu0 %v1758, 32
    %v1761 = vpop.permute.xlu0 %1760
    %v1763 = vmul.f32 %v1742, %v1761
    %1765 = vrot.lane.b32.xlu0 %v1763, 80
    %v1766 = vpop.permute.xlu0 %1765
    %v1769 = vrot.slane %v1657, 2
    %1770 = vrot.lane.b32.xlu0 %v1769, 96
    %v1771 = vpop.permute.xlu0 %1770
    %v1773 = vsel %vm177, %v1766, %v1771
    %v1775 = vrot.slane %v1773, 6
    %v1776 = vsel %vm287, %v1775, 0
    %1778 = vmatprep.subr.mxu0 0.0
    %1779 = vmatpush1.msra.mxu0 0.0
    %1780 = vmatprep.subr.mxu0 0.0
    %1781 = vmatpush1.msra.mxu0 0.0
    %1782 = vmatprep.subr.mxu0 0.0
    %1783 = vmatpush1.msra.mxu0 0.0
    %1784 = vmatprep.subr.mxu0 0.0
    %1785 = vmatpush1.msra.mxu0 0.0
    %1786 = vmatprep.subr.mxu0 0.0
    %1787 = vmatpush1.msra.mxu0 0.0
    %1788 = vmatprep.subr.mxu0 0.0
    %1789 = vmatpush1.msra.mxu0 0.0
    %1790 = vmatprep.subr.mxu0 0.0
    %1791 = vmatpush1.msra.mxu0 0.0
    %1792 = vmatprep.subr.mxu0 0.0
    %1793 = vmatpush1.msra.mxu0 0.0
    %1794 = vmatprep.subr.mxu0 0.0
    %1795 = vmatpush1.msra.mxu0 0.0
    %1796 = vmatprep.subr.mxu0 0.0
    %1797 = vmatpush1.msra.mxu0 0.0
    %1798 = vmatprep.subr.mxu0 0.0
    %1799 = vmatpush1.msra.mxu0 0.0
    %1800 = vmatprep.subr.mxu0 0.0
    %1801 = vmatpush1.msra.mxu0 0.0
    %1802 = vmatprep.subr.mxu0 0.0
    %1803 = vmatpush1.msra.mxu0 %v85
    %1804 = vmatprep.subr.mxu0 0.0
    %1805 = vmatpush1.msra.mxu0 %v84
    %1806 = vmatprep.subr.mxu0 0.0
    %1807 = vmatpush1.msra.mxu0 %v83
    %1808 = vmatprep.subr.mxu0 0.0
    %1809 = vmatpush1.msra.mxu0 %v82
    %1810 = vmatprep.subr.mxu0 0.0
    %1811 = vmatpush2.msra.mxu0 0.0
    %1812 = vmatprep.subr.mxu0 0.0
    %1813 = vmatpush2.msra.mxu0 0.0
    %1814 = vmatprep.subr.mxu0 0.0
    %1815 = vmatpush2.msra.mxu0 0.0
    %1816 = vmatprep.subr.mxu0 0.0
    %1817 = vmatpush2.msra.mxu0 0.0
    %1818 = vmatprep.subr.mxu0 0.0
    %1819 = vmatpush2.msra.mxu0 0.0
    %1820 = vmatprep.subr.mxu0 0.0
    %1821 = vmatpush2.msra.mxu0 0.0
    %1822 = vmatprep.subr.mxu0 0.0
    %1823 = vmatpush2.msra.mxu0 0.0
    %1824 = vmatprep.subr.mxu0 0.0
    %1825 = vmatpush2.msra.mxu0 0.0
    %1826 = vmatprep.subr.mxu0 0.0
    %1827 = vmatpush2.msra.mxu0 0.0
    %1828 = vmatprep.subr.mxu0 0.0
    %1829 = vmatpush2.msra.mxu0 0.0
    %1830 = vmatprep.subr.mxu0 0.0
    %1831 = vmatpush2.msra.mxu0 0.0
    %1832 = vmatprep.subr.mxu0 0.0
    %1833 = vmatpush2.msra.mxu0 0.0
    %1834 = vmatprep.subr.mxu0 0.0
    %1835 = vmatpush2.msra.mxu0 0.0
    %1836 = vmatprep.subr.mxu0 0.0
    %1837 = vmatpush2.msra.mxu0 0.0
    %1838 = vmatprep.subr.mxu0 0.0
    %1839 = vmatpush2.msra.mxu0 0.0
    %1840 = vmatprep.subr.mxu0 0.0
    %1841 = vmatpush2.msra.mxu0 0.0
    %1842 = vmatprep.mubr.f32.mxu0 0.0
    %1843 = vmatmul.mubr.f32.gmra.mxu0 %v1776
    %v1844 = vpop.f32.mrf.mxu0
    %v1845 = vadd.f32 %v285, %v1844
    %v1846 = vpop.f32.mrf.mxu0
    %1847 = vdwg.mxu0
    %v1848 = vxor.u32 %v1845, 2147483648
    %v1849 = vmul.f32 %v1848, 1.442695
    %v1850 = vpow.pop %v1849
    %v1851 = vadd.f32 %v1850, 1.0
    %v1852 = vrcp.pop %v1851
    %v1853 = vmul.f32 1.0, %v1852
    %v1854 = vtanh.pop %v1845
    %v1855 = vmul.f32 %v1853, %v1651
    %1857 = vrot.lane.b32.xlu0 %v1854, 96
    %v1858 = vpop.permute.xlu0 %1857
    %v1860 = vmul.f32 %v1853, %v1858
    %1862 = vrot.lane.b32.xlu0 %v1860, 16
    %v1863 = vpop.permute.xlu0 %1862
    %v1865 = vadd.f32 %v1855, %v1863
    %v1866 = vtanh.pop %v1865
    %1868 = vrot.lane.b32.xlu0 %v1866, 32
    %v1869 = vpop.permute.xlu0 %1868
    %v1871 = vmul.f32 %v1853, %v1869
    %v1872 = vld [vmem:[%s6] sm:$0xff]
    %v1873 = vld [vmem:[%s6 + $0x8] sm:$0xff]
    %v1874 = vld [vmem:[%s7] sm:$0x1]
    %v1876 = vlaneseq
    %v1877 = vshrl.u32 %v1876, 7
    %v1878 = vsub.s32 0, %v1877
    %v1879 = vrot.slane %v1874, %v1878
    %1882 = vrot.lane.b32.xlu0 %v1871, 80
    %v1883 = vpop.permute.xlu0 %1882
    %v1884 = vsel %vm177, %v1883, 0
    %1886 = vmatprep.subr.mxu0 0.0
    %1887 = vmatpush1.msra.mxu0 0.0
    %1888 = vmatprep.subr.mxu0 0.0
    %1889 = vmatpush1.msra.mxu0 0.0
    %1890 = vmatprep.subr.mxu0 0.0
    %1891 = vmatpush1.msra.mxu0 0.0
    %1892 = vmatprep.subr.mxu0 0.0
    %1893 = vmatpush1.msra.mxu0 0.0
    %1894 = vmatprep.subr.mxu0 0.0
    %1895 = vmatpush1.msra.mxu0 0.0
    %1896 = vmatprep.subr.mxu0 0.0
    %1897 = vmatpush1.msra.mxu0 0.0
    %1898 = vmatprep.subr.mxu0 0.0
    %1899 = vmatpush1.msra.mxu0 0.0
    %1900 = vmatprep.subr.mxu0 0.0
    %1901 = vmatpush1.msra.mxu0 0.0
    %1902 = vmatprep.subr.mxu0 0.0
    %1903 = vmatpush1.msra.mxu0 0.0
    %1904 = vmatprep.subr.mxu0 0.0
    %1905 = vmatpush1.msra.mxu0 0.0
    %1906 = vmatprep.subr.mxu0 0.0
    %1907 = vmatpush1.msra.mxu0 0.0
    %1908 = vmatprep.subr.mxu0 0.0
    %1909 = vmatpush1.msra.mxu0 0.0
    %1910 = vmatprep.subr.mxu0 0.0
    %1911 = vmatpush1.msra.mxu0 0.0
    %1912 = vmatprep.subr.mxu0 0.0
    %1913 = vmatpush1.msra.mxu0 0.0
    %1914 = vmatprep.subr.mxu0 0.0
    %1915 = vmatpush1.msra.mxu0 %v1873
    %1916 = vmatprep.subr.mxu0 0.0
    %1917 = vmatpush1.msra.mxu0 %v1872
    %1918 = vmatprep.subr.mxu0 0.0
    %1919 = vmatpush2.msra.mxu0 0.0
    %1920 = vmatprep.subr.mxu0 0.0
    %1921 = vmatpush2.msra.mxu0 0.0
    %1922 = vmatprep.subr.mxu0 0.0
    %1923 = vmatpush2.msra.mxu0 0.0
    %1924 = vmatprep.subr.mxu0 0.0
    %1925 = vmatpush2.msra.mxu0 0.0
    %1926 = vmatprep.subr.mxu0 0.0
    %1927 = vmatpush2.msra.mxu0 0.0
    %1928 = vmatprep.subr.mxu0 0.0
    %1929 = vmatpush2.msra.mxu0 0.0
    %1930 = vmatprep.subr.mxu0 0.0
    %1931 = vmatpush2.msra.mxu0 0.0
    %1932 = vmatprep.subr.mxu0 0.0
    %1933 = vmatpush2.msra.mxu0 0.0
    %1934 = vmatprep.subr.mxu0 0.0
    %1935 = vmatpush2.msra.mxu0 0.0
    %1936 = vmatprep.subr.mxu0 0.0
    %1937 = vmatpush2.msra.mxu0 0.0
    %1938 = vmatprep.subr.mxu0 0.0
    %1939 = vmatpush2.msra.mxu0 0.0
    %1940 = vmatprep.subr.mxu0 0.0
    %1941 = vmatpush2.msra.mxu0 0.0
    %1942 = vmatprep.subr.mxu0 0.0
    %1943 = vmatpush2.msra.mxu0 0.0
    %1944 = vmatprep.subr.mxu0 0.0
    %1945 = vmatpush2.msra.mxu0 0.0
    %1946 = vmatprep.subr.mxu0 0.0
    %1947 = vmatpush2.msra.mxu0 0.0
    %1948 = vmatprep.subr.mxu0 0.0
    %1949 = vmatpush2.msra.mxu0 0.0
    %1950 = vmatprep.mubr.f32.mxu0 0.0
    %1951 = vmatmul.mubr.f32.gmra.mxu0 %v1884
    %v1952 = vpop.f32.mrf.mxu0
    %v1953 = vadd.f32 %v1879, %v1952
    %v1954 = vpop.f32.mrf.mxu0
    %1955 = vdwg.mxu0
    %vm1956 = vcmask 9216
    %1957 = vst.msk [vmem:[#allocation8] sm:$0x3] %vm1956, %v1953
    // Predicated region
    $region46: #{tpu_custom_call.1} parent=1 // pred_check
      _
    $region47: #{tpu_custom_call.1} parent=1 // pred_check_branch
      %1959 = sbr.rel (0) target = $region49
    $region48: #{tpu_custom_call.1} parent=1 // pred_region
      %s1961 = ssub.s32 32, 32
      %1962 = vsyncadd [#allocation4], %s1961
      %s1964 = sshll.u32 [#allocation8], 4
      %s1965 = int_to_ptr.vmem [resolvable:$true] %s1964
      %1967 = dma.vmem_to_hbm [thread:$0]  %s1965, 32, %s8, [#allocation4]
    $region49: #{tpu_custom_call.1} parent=1 // pred_fallthru
      _
    // Predicated region
    $region50: #{tpu_custom_call.1} parent=1 // pred_check
      _
    $region51: #{tpu_custom_call.1} parent=1 // pred_check_branch
      %1969 = sbr.rel (0) target = $region53
    $region52: #{tpu_custom_call.1} parent=1 // pred_region
      %1970 = dma.done [#allocation4], 32
    $region53: #{tpu_custom_call.1} parent=1 // pred_fallthru
      _
    %1971 = vsyncpa [#allocation3], 1
    %1972 = vsyncpa [#allocation6], 1
    %1973 = vsyncpa [#allocation4], 1

</llo_original>
